<compile_context>
chip_gen: v5e
topology: v5e:2x2
jax: 0.10.0
libtpu: 0.0.40
codegen_flags: <defaults>
</compile_context>

<pallas_src>
import functools

import jax
import jax.numpy as jnp
from jax import lax
from jax.experimental import pallas as pl
from jax.experimental.pallas import tpu as pltpu


_BN_EPS = 1e-5
_VMEM_LIMIT = 48 * 1024 * 1024   # fits largest double-buffered weight tile, < v7x 64 MiB VMEM
_COMPUTE_DTYPE = None            # set to jnp.bfloat16 for the native-MXU bf16 path


# ---------------------------------------------------------------------------
# in-kernel helpers
# ---------------------------------------------------------------------------
def _mm(a, b, precision):
    """MXU matmul with f32 accumulation (optionally bf16 operands)."""
    if _COMPUTE_DTYPE is not None:
        a = a.astype(_COMPUTE_DTYPE)
        b = b.astype(_COMPUTE_DTYPE)
    return jnp.dot(a, b, preferred_element_type=jnp.float32, precision=precision)


def _mish(x):
    # mish(x) = x * tanh(softplus(x)); stable softplus = max(x,0) + log(1 + exp(-|x|))
    sp = jnp.maximum(x, 0.0) + jnp.log(1.0 + jnp.exp(-jnp.abs(x)))
    return x * jnp.tanh(sp)


# ---------------------------------------------------------------------------
# kernels
# ---------------------------------------------------------------------------
def _cbm1x1_kernel(x_ref, w_ref, b_ref, o_ref, *, precision):
    # x_ref: (TM, Cin)  w_ref: (Cin, Cout)  b_ref: (1, Cout)  o_ref: (TM, Cout)
    y = _mm(x_ref[...], w_ref[...], precision) + b_ref[...]
    o_ref[...] = _mish(y).astype(o_ref.dtype)


def _cbm1x1_cat_kernel(x1_ref, x0_ref, w1_ref, w0_ref, b_ref, o_ref, *, precision):
    # fused channel-concat + 1x1 CBM: y = mish(x1 @ W1 + x0 @ W0 + b)
    y = _mm(x1_ref[...], w1_ref[...], precision)
    y = y + _mm(x0_ref[...], w0_ref[...], precision)
    y = y + b_ref[...]
    o_ref[...] = _mish(y).astype(o_ref.dtype)


def _conv3x3_s1_rows(x_ref, w_ref, b_ref, o_ref, res_ref, *, precision):
    # x_ref: (1, H+2, W+2, Cin) zero-padded image; w_ref: (9, Cin, Cout) taps (dh*3+dw)
    # b_ref: (1, Cout); o_ref: (1, H, W, Cout); res_ref: optional residual (added post-Mish)
    _, h_out, w_out, _ = o_ref.shape
    bias = b_ref[...]

    def row(h, carry):
        acc = jnp.zeros((w_out, o_ref.shape[3]), jnp.float32)
        for dh in range(3):
            xrow = x_ref[0, h + dh]                       # (W+2, Cin)
            for dw in range(3):
                seg = xrow[dw:dw + w_out, :]              # (W, Cin) static slice
                acc = acc + _mm(seg, w_ref[dh * 3 + dw], precision)
        y = _mish(acc + bias)
        if res_ref is not None:
            y = y + res_ref[0, h]
        o_ref[0, h] = y.astype(o_ref.dtype)
        return carry

    lax.fori_loop(0, h_out, row, 0)


def _conv3x3_s2_rows(xe_ref, xo_ref, w_ref, b_ref, o_ref, *, precision):
    # stride-2 3x3 CBM; xe/xo are the even/odd column-parity slices of the padded image,
    # so every load below is contiguous.  xe_ref, xo_ref: (1, H+2, Wo+1, Cin)
    _, h_out, w_out, _ = o_ref.shape
    bias = b_ref[...]

    def row(h, carry):
        acc = jnp.zeros((w_out, o_ref.shape[3]), jnp.float32)
        for dh in range(3):
            r = 2 * h + dh
            erow = xe_ref[0, r]                           # padded columns 0,2,4,...
            orow = xo_ref[0, r]                           # padded columns 1,3,5,...
            acc = acc + _mm(erow[0:w_out, :], w_ref[dh * 3 + 0], precision)      # dw = 0
            acc = acc + _mm(orow[0:w_out, :], w_ref[dh * 3 + 1], precision)      # dw = 1
            acc = acc + _mm(erow[1:w_out + 1, :], w_ref[dh * 3 + 2], precision)  # dw = 2
        o_ref[0, h] = _mish(acc + bias).astype(o_ref.dtype)
        return carry

    lax.fori_loop(0, h_out, row, 0)


# ---------------------------------------------------------------------------
# pallas_call builders (lru_cached so repeated layers reuse compiled executables)
# ---------------------------------------------------------------------------
def _compiler_params(n_axes):
    return pltpu.CompilerParams(
        dimension_semantics=("parallel",) * n_axes,
        vmem_limit_bytes=_VMEM_LIMIT)


def _pick_tm(m, cap=512):
    """Largest row tile <= cap dividing M (multiple of 8 -> clean sublane tiling)."""
    if m <= cap:
        return m
    for t in range(cap, 0, -1):
        if m % t == 0 and t % 8 == 0:
            return t
    return m


@functools.lru_cache(maxsize=None)
def _build_cbm1x1(m, cin, cout, tm, precision):
    kernel = functools.partial(_cbm1x1_kernel, precision=precision)
    return jax.jit(pl.pallas_call(
        kernel,
        out_shape=jax.ShapeDtypeStruct((m, cout), jnp.float32),
        grid_spec=pltpu.PrefetchScalarGridSpec(
            num_scalar_prefetch=0,
            grid=(m // tm,),
            in_specs=[
                pl.BlockSpec((tm, cin), lambda i: (i, 0)),
                pl.BlockSpec((cin, cout), lambda i: (0, 0)),
                pl.BlockSpec((1, cout), lambda i: (0, 0)),
            ],
            out_specs=pl.BlockSpec((tm, cout), lambda i: (i, 0)),
        ),
        compiler_params=_compiler_params(1),
    ))


@functools.lru_cache(maxsize=None)
def _build_cbm1x1_cat(m, c1, c0, cout, tm, precision):
    kernel = functools.partial(_cbm1x1_cat_kernel, precision=precision)
    return jax.jit(pl.pallas_call(
        kernel,
        out_shape=jax.ShapeDtypeStruct((m, cout), jnp.float32),
        grid_spec=pltpu.PrefetchScalarGridSpec(
            num_scalar_prefetch=0,
            grid=(m // tm,),
            in_specs=[
                pl.BlockSpec((tm, c1), lambda i: (i, 0)),
                pl.BlockSpec((tm, c0), lambda i: (i, 0)),
                pl.BlockSpec((c1, cout), lambda i: (0, 0)),
                pl.BlockSpec((c0, cout), lambda i: (0, 0)),
                pl.BlockSpec((1, cout), lambda i: (0, 0)),
            ],
            out_specs=pl.BlockSpec((tm, cout), lambda i: (i, 0)),
        ),
        compiler_params=_compiler_params(1),
    ))


@functools.lru_cache(maxsize=None)
def _build_cbm3x3_s1(n, h, w, cin, cout, with_res, precision):
    hp, wp = h + 2, w + 2
    if with_res:
        def kernel(x_ref, w_ref, b_ref, res_ref, o_ref):
            _conv3x3_s1_rows(x_ref, w_ref, b_ref, o_ref, res_ref, precision=precision)
    else:
        def kernel(x_ref, w_ref, b_ref, o_ref):
            _conv3x3_s1_rows(x_ref, w_ref, b_ref, o_ref, None, precision=precision)

    in_specs = [
        pl.BlockSpec((1, hp, wp, cin), lambda i: (i, 0, 0, 0)),
        pl.BlockSpec((9, cin, cout), lambda i: (0, 0, 0)),
        pl.BlockSpec((1, cout), lambda i: (0, 0)),
    ]
    if with_res:
        in_specs.append(pl.BlockSpec((1, h, w, cout), lambda i: (i, 0, 0, 0)))

    return jax.jit(pl.pallas_call(
        kernel,
        out_shape=jax.ShapeDtypeStruct((n, h, w, cout), jnp.float32),
        grid_spec=pltpu.PrefetchScalarGridSpec(
            num_scalar_prefetch=0,
            grid=(n,),
            in_specs=in_specs,
            out_specs=pl.BlockSpec((1, h, w, cout), lambda i: (i, 0, 0, 0)),
        ),
        compiler_params=_compiler_params(1),
    ))


@functools.lru_cache(maxsize=None)
def _build_cbm3x3_s2(n, h, w, cin, cout, precision):
    hp = h + 2
    ho, wo = h // 2, w // 2
    kernel = functools.partial(_conv3x3_s2_rows, precision=precision)
    return jax.jit(pl.pallas_call(
        kernel,
        out_shape=jax.ShapeDtypeStruct((n, ho, wo, cout), jnp.float32),
        grid_spec=pltpu.PrefetchScalarGridSpec(
            num_scalar_prefetch=0,
            grid=(n,),
            in_specs=[
                pl.BlockSpec((1, hp, wo + 1, cin), lambda i: (i, 0, 0, 0)),
                pl.BlockSpec((1, hp, wo + 1, cin), lambda i: (i, 0, 0, 0)),
                pl.BlockSpec((9, cin, cout), lambda i: (0, 0, 0)),
                pl.BlockSpec((1, cout), lambda i: (0, 0)),
            ],
            out_specs=pl.BlockSpec((1, ho, wo, cout), lambda i: (i, 0, 0, 0)),
        ),
        compiler_params=_compiler_params(1),
    ))


# ---------------------------------------------------------------------------
# layer wrappers (NHWC), BN folding
# ---------------------------------------------------------------------------
def _fold_bn(p):
    """Fold inference-mode BatchNorm into the conv weight and a bias vector."""
    bn = p["bn"]
    scale = bn["gamma"] / jnp.sqrt(bn["var"] + _BN_EPS)
    w = p["w"] * scale[:, None, None, None]                 # (Cout, Cin, k, k)
    b = bn["beta"] - bn["mean"] * scale                     # (Cout,)
    return w, b


def _w_taps(wf, cin, cout):
    # (Cout, Cin, 3, 3) -> (9, Cin, Cout), tap index = dh*3 + dw
    return jnp.transpose(wf, (2, 3, 1, 0)).reshape(9, cin, cout)


def cbm_1x1(x, p, precision):
    """CBM with a 1x1 conv; x NHWC.  Runs as a row-tiled (M, Cin)@(Cin, Cout) grid."""
    n, h, w, cin = x.shape
    cout = p["cout"]
    wf, b = _fold_bn(p)
    w_mat = wf.reshape(cout, cin).T
    m = n * h * w
    tm = _pick_tm(m)
    fn = _build_cbm1x1(m, cin, cout, tm, precision)
    y = fn(x.reshape(m, cin), w_mat, b.reshape(1, cout))
    return y.reshape(n, h, w, cout)


def cbm_1x1_cat(x1, x0, p, precision):
    """CBM 1x1 on channel-concat([x1, x0]) without materializing the concat."""
    n, h, w, c1 = x1.shape
    c0 = x0.shape[3]
    cout = p["cout"]
    wf, b = _fold_bn(p)
    w_mat = wf.reshape(cout, c1 + c0)
    w1 = w_mat[:, :c1].T
    w0 = w_mat[:, c1:].T
    m = n * h * w
    tm = _pick_tm(m)
    fn = _build_cbm1x1_cat(m, c1, c0, cout, tm, precision)
    y = fn(x1.reshape(m, c1), x0.reshape(m, c0), w1, w0, b.reshape(1, cout))
    return y.reshape(n, h, w, cout)


def cbm_3x3_s1(x, p, precision, residual=None):
    """CBM with a 3x3 / stride-1 conv; optional residual added after Mish."""
    n, h, w, cin = x.shape
    cout = p["cout"]
    wf, b = _fold_bn(p)
    if cin < 8:  # pad the stem's Cin=3 up to 8 with zero channels (clean MXU K-dim)
        pad_c = 8 - cin
        x = jnp.pad(x, ((0, 0), (0, 0), (0, 0), (0, pad_c)))
        wf = jnp.pad(wf, ((0, 0), (0, pad_c), (0, 0), (0, 0)))
        cin = 8
    xp = jnp.pad(x, ((0, 0), (1, 1), (1, 1), (0, 0)))        # zero pad, as Conv2d(pad=1)
    fn = _build_cbm3x3_s1(n, h, w, cin, cout, residual is not None, precision)
    args = [xp, _w_taps(wf, cin, cout), b.reshape(1, cout)]
    if residual is not None:
        args.append(residual)
    return fn(*args)


def cbm_3x3_s2(x, p, precision):
    """CBM with a 3x3 / stride-2 downsampling conv."""
    n, h, w, cin = x.shape
    assert h % 2 == 0 and w % 2 == 0
    cout = p["cout"]
    wf, b = _fold_bn(p)
    xp = jnp.pad(x, ((0, 0), (1, 1), (1, 1), (0, 0)))
    xe = xp[:, :, 0::2, :]                                   # padded columns 0,2,...
    xo = xp[:, :, 1::2, :]                                   # padded columns 1,3,...
    fn = _build_cbm3x3_s2(n, h, w, cin, cout, precision)
    return fn(xe, xo, _w_taps(wf, cin, cout), b.reshape(1, cout))


# ---------------------------------------------------------------------------
# network (mirrors the PyTorch module graph)
# ---------------------------------------------------------------------------
def residual_unit(x, p, precision):
    h = cbm_1x1(x, p["cbm1"], precision)
    return cbm_3x3_s1(h, p["cbm2"], precision, residual=x)   # x + block(x)


def residual_block(x, p, precision):
    x = cbm_3x3_s2(x, p["down"], precision)
    x0 = cbm_1x1(x, p["split0"], precision)
    x1 = cbm_1x1(x, p["split1"], precision)
    for unit in p["units"]:
        x1 = residual_unit(x1, unit, precision)
    x1 = cbm_1x1(x1, p["blocks_out"], precision)
    return cbm_1x1_cat(x1, x0, p["concat"], precision)       # cat([x1, x0], C) + 1x1 CBM


def cspdarknet_forward(x_nchw, params, precision):
    """CSPDarkNet forward: NCHW in, (x3, x4, x5) NCHW out (PyTorch convention)."""
    x = jnp.transpose(x_nchw, (0, 2, 3, 1))                  # single NCHW -> NHWC transpose
    x = cbm_3x3_s1(x, params["conv1"], precision)
    x = residual_block(x, params["stages"][0], precision)
    x = residual_block(x, params["stages"][1], precision)
    x3 = residual_block(x, params["stages"][2], precision)
    x4 = residual_block(x3, params["stages"][3], precision)
    x5 = residual_block(x4, params["stages"][4], precision)
    to_nchw = lambda t: jnp.transpose(t, (0, 3, 1, 2))
    return to_nchw(x3), to_nchw(x4), to_nchw(x5)


# ---------------------------------------------------------------------------
# parameter construction (random, deterministic; mirrors nn.Module structure)
# ---------------------------------------------------------------------------
def _bn_init(key, c):
    k1, k2, k3, k4 = jax.random.split(key, 4)
    return dict(
        gamma=1.0 + 0.1 * jax.random.normal(k1, (c,), jnp.float32),
        beta=0.1 * jax.random.normal(k2, (c,), jnp.float32),
        mean=0.1 * jax.random.normal(k3, (c,), jnp.float32),
        var=jax.random.uniform(k4, (c,), jnp.float32, minval=0.5, maxval=1.5),
    )


def _cbm_init(key, cin, cout, k):
    kw, kb = jax.random.split(key)
    w = jax.random.normal(kw, (cout, cin, k, k), jnp.float32) * (2.0 / (cin * k * k)) ** 0.5
    return dict(w=w, bn=_bn_init(kb, cout), k=k, cin=cin, cout=cout)


def _unit_init(key, cin, hidden):
    k1, k2 = jax.random.split(key)
    return dict(cbm1=_cbm_init(k1, cin, hidden, 1), cbm2=_cbm_init(k2, hidden, cin, 3))


def _stage_init(key, cin, cout, n_blocks):
    ks = jax.random.split(key, n_blocks + 5)
    p = dict(down=_cbm_init(ks[0], cin, cout, 3))
    if n_blocks == 1:
        p["split0"] = _cbm_init(ks[1], cout, cout, 1)
        p["split1"] = _cbm_init(ks[2], cout, cout, 1)
        p["units"] = [_unit_init(ks[3], cout, cout // 2)]
        p["blocks_out"] = _cbm_init(ks[4], cout, cout, 1)
        p["concat"] = _cbm_init(ks[5], cout * 2, cout, 1)
    else:
        p["split0"] = _cbm_init(ks[1], cout, cout // 2, 1)
        p["split1"] = _cbm_init(ks[2], cout, cout // 2, 1)
        p["units"] = [_unit_init(ks[3 + j], cout // 2, cout // 2) for j in range(n_blocks)]
        p["blocks_out"] = _cbm_init(ks[3 + n_blocks], cout // 2, cout // 2, 1)
        p["concat"] = _cbm_init(ks[4 + n_blocks], cout, cout, 1)
    return p


def init_params(key):
    layers = [1, 2, 8, 8, 4]
    channels = [32, 64, 128, 256, 512, 1024]
    ks = jax.random.split(key, 6)
    return dict(
        conv1=_cbm_init(ks[0], 3, 32, 3),
        stages=[_stage_init(ks[i + 1], channels[i], channels[i + 1], layers[i])
                for i in range(5)],
    )


# ---------------------------------------------------------------------------
# pure-JAX / XLA reference (un-fused conv + BN + Mish, NCHW) for the self-check
# ---------------------------------------------------------------------------
def _ref_cbm(x, p, stride, precision):
    k = p["k"]
    pad = k // 2
    y = lax.conv_general_dilated(
        x, p["w"], window_strides=(stride, stride), padding=[(pad, pad), (pad, pad)],
        dimension_numbers=("NCHW", "OIHW", "NCHW"), precision=precision)
    bn = p["bn"]
    y = ((y - bn["mean"][None, :, None, None])
         / jnp.sqrt(bn["var"][None, :, None, None] + _BN_EPS)
         * bn["gamma"][None, :, None, None] + bn["beta"][None, :, None, None])
    sp = jnp.maximum(y, 0.0) + jnp.log1p(jnp.exp(-jnp.abs(y)))
    return y * jnp.tanh(sp)


def _ref_unit(x, p, precision):
    h = _ref_cbm(x, p["cbm1"], 1, precision)
    h = _ref_cbm(h, p["cbm2"], 1, precision)
    return x + h


def _ref_block(x, p, precision):
    x = _ref_cbm(x, p["down"], 2, precision)
    x0 = _ref_cbm(x, p["split0"], 1, precision)
    x1 = _ref_cbm(x, p["split1"], 1, precision)
    for unit in p["units"]:
        x1 = _ref_unit(x1, unit, precision)
    x1 = _ref_cbm(x1, p["blocks_out"], 1, precision)
    return _ref_cbm(jnp.concatenate([x1, x0], axis=1), p["concat"], 1, precision)


def ref_forward(x, params, precision):
    x = _ref_cbm(x, params["conv1"], 1, precision)
    x = _ref_block(x, params["stages"][0], precision)
    x = _ref_block(x, params["stages"][1], precision)
    x3 = _ref_block(x, params["stages"][2], precision)
    x4 = _ref_block(x3, params["stages"][3], precision)
    x5 = _ref_block(x4, params["stages"][4], precision)
    return x3, x4, x5


# ---------------------------------------------------------------------------
def _probe_matmul_precision():
    """Use Precision.HIGHEST inside the kernels if the Mosaic lowering accepts it
    (keeps the f32 matmuls numerically in lock-step with the XLA reference);
    otherwise fall back to the default precision."""
    def k(a_ref, b_ref, o_ref):
        o_ref[...] = jnp.dot(a_ref[...], b_ref[...],
                             preferred_element_type=jnp.float32,
                             precision=lax.Precision.HIGHEST)
    try:
        a = jnp.ones((8, 128), jnp.float32)
        b = jnp.ones((128, 128), jnp.float32)
        out = pl.pallas_call(k, out_shape=jax.ShapeDtypeStruct((8, 128), jnp.float32))(a, b)
        jax.block_until_ready(out)
        return lax.Precision.HIGHEST
    except Exception:
        return None


if __name__ == "__main__":
    # Smallest spatial size that keeps all 5 stages meaningful (H/32 = 2); channel widths
    # are fixed by the module (32..1024).
    N, H, W = 2, 64, 64

    key = jax.random.PRNGKey(0)
    kx, kp = jax.random.split(key)
    x = jax.random.normal(kx, (N, 3, H, W), jnp.float32)
    params = init_params(kp)

    precision = _probe_matmul_precision()

    x3, x4, x5 = cspdarknet_forward(x, params, precision)
    x3, x4, x5 = jax.block_until_ready((x3, x4, x5))

    assert x3.shape == (N, 256, H // 8, W // 8), x3.shape
    assert x4.shape == (N, 512, H // 16, W // 16), x4.shape
    assert x5.shape == (N, 1024, H // 32, W // 32), x5.shape

    r3, r4, r5 = ref_forward(x, params, lax.Precision.HIGHEST)
    for name, got, want in (("x3", x3, r3), ("x4", x4, r4), ("x5", x5, r5)):
        err = float(jnp.max(jnp.abs(got - want)))
        assert jnp.allclose(got, want, atol=2e-2, rtol=2e-2), (name, err)

    print("KERNEL_OK")
</pallas_src>

<mosaic_0001>
module attributes {stable_mosaic.version = 11 : i64} {
  func.func @k(%arg0: memref<8x128xf32, #tpu.memory_space<vmem>>, %arg1: memref<128x128xf32, #tpu.memory_space<vmem>>, %arg2: memref<8x128xf32, #tpu.memory_space<vmem>>) attributes {dimension_semantics = [], scalar_prefetch = 0 : i64, scratch_operands = 0 : i64, tpu.core_type = #tpu.core_type<tc>} {
    %c0 = arith.constant 0 : index
    %c0_0 = arith.constant 0 : index
    %0 = vector.load %arg0[%c0, %c0_0] : memref<8x128xf32, #tpu.memory_space<vmem>>, vector<8x128xf32>
    %c0_1 = arith.constant 0 : index
    %c0_2 = arith.constant 0 : index
    %1 = vector.load %arg1[%c0_1, %c0_2] : memref<128x128xf32, #tpu.memory_space<vmem>>, vector<128x128xf32>
    %cst = arith.constant dense<0.000000e+00> : vector<8x128xf32>
    %2 = tpu.matmul %0, %1, %cst {dimension_numbers = #tpu.dot_dimension_numbers<[1], [0], [0], [1], [0, 0, 1, 1], [], []>, precision = #tpu.contract_precision<fp32>} : vector<8x128xf32>, vector<128x128xf32>, vector<8x128xf32> -> vector<8x128xf32>
    %c0_3 = arith.constant 0 : index
    %c0_4 = arith.constant 0 : index
    %3 = vector.load %arg2[%c0_3, %c0_4] : memref<8x128xf32, #tpu.memory_space<vmem>>, vector<8x128xf32>
    tpu.vector_store %arg2[%c0_3, %c0_4], %2 {strides = array<i32>} : memref<8x128xf32, #tpu.memory_space<vmem>>, vector<8x128xf32>,
    return
  }
}

module attributes {stable_mosaic.version = 11 : i64} {
  func.func @kernel(%arg0: i32, %arg1: memref<1x66x66x8xf32, #tpu.memory_space<vmem>>, %arg2: memref<9x8x32xf32, #tpu.memory_space<vmem>>, %arg3: memref<1x32xf32, #tpu.memory_space<vmem>>, %arg4: memref<1x64x64x32xf32, #tpu.memory_space<vmem>>) attributes {dimension_semantics = [#tpu.dimension_semantics<parallel>], iteration_bounds = array<i64: 2>, scalar_prefetch = 0 : i64, scratch_operands = 0 : i64, tpu.core_type = #tpu.core_type<tc>, window_params = [{transform_indices = @transform_0, window_bounds = array<i64: 1, 66, 66, 8>}, {pipeline_mode = #tpu.pipeline_mode<synchronous>, transform_indices = @transform_1, window_bounds = array<i64: 9, 8, 32>}, {pipeline_mode = #tpu.pipeline_mode<synchronous>, transform_indices = @transform_2, window_bounds = array<i64: 1, 32>}, {transform_indices = @transform_3, window_bounds = array<i64: 1, 64, 64, 32>}]} {
    %c0 = arith.constant 0 : index
    %c0_0 = arith.constant 0 : index
    %0 = vector.load %arg3[%c0, %c0_0] : memref<1x32xf32, #tpu.memory_space<vmem>>, vector<1x32xf32>
    %c0_i32 = arith.constant 0 : i32
    %c64_i32 = arith.constant 64 : i32
    %1 = arith.addi %c0_i32, %c64_i32 : i32
    %c1_i32 = arith.constant 1 : i32
    scf.for %arg5 = %c0_i32 to %1 step %c1_i32  : i32 {
      %cst = arith.constant 0.000000e+00 : f32
      %2 = vector.broadcast %cst : f32 to vector<64x32xf32>
      %c0_i32_2 = arith.constant 0 : i32
      %3 = arith.addi %arg5, %c0_i32_2 : i32
      %c0_3 = arith.constant 0 : index
      %4 = arith.index_cast %3 : i32 to index
      %c0_4 = arith.constant 0 : index
      %c0_5 = arith.constant 0 : index
      %5 = vector.load %arg1[%c0_3, %4, %c0_4, %c0_5] : memref<1x66x66x8xf32, #tpu.memory_space<vmem>>, vector<1x1x66x8xf32>
      %6 = vector.shape_cast %5 : vector<1x1x66x8xf32> to vector<66x8xf32>
      %7 = vector.extract_strided_slice %6 {offsets = [0, 0], sizes = [64, 8], strides = [1, 1]} : vector<66x8xf32> to vector<64x8xf32>
      %c0_6 = arith.constant 0 : index
      %c0_7 = arith.constant 0 : index
      %c0_8 = arith.constant 0 : index
      %8 = vector.load %arg2[%c0_6, %c0_7, %c0_8] : memref<9x8x32xf32, #tpu.memory_space<vmem>>, vector<1x8x32xf32>
      %9 = vector.shape_cast %8 : vector<1x8x32xf32> to vector<8x32xf32>
      %cst_9 = arith.constant dense<0.000000e+00> : vector<64x32xf32>
      %10 = tpu.matmul %7, %9, %cst_9 {dimension_numbers = #tpu.dot_dimension_numbers<[1], [0], [0], [1], [0, 0, 1, 1], [], []>} : vector<64x8xf32>, vector<8x32xf32>, vector<64x32xf32> -> vector<64x32xf32>
      %11 = arith.addf %2, %10 : vector<64x32xf32>
      %12 = vector.extract_strided_slice %6 {offsets = [1, 0], sizes = [64, 8], strides = [1, 1]} : vector<66x8xf32> to vector<64x8xf32>
      %c1 = arith.constant 1 : index
      %c0_10 = arith.constant 0 : index
      %c0_11 = arith.constant 0 : index
      %13 = vector.load %arg2[%c1, %c0_10, %c0_11] : memref<9x8x32xf32, #tpu.memory_space<vmem>>, vector<1x8x32xf32>
      %14 = vector.shape_cast %13 : vector<1x8x32xf32> to vector<8x32xf32>
      %cst_12 = arith.constant dense<0.000000e+00> : vector<64x32xf32>
      %15 = tpu.matmul %12, %14, %cst_12 {dimension_numbers = #tpu.dot_dimension_numbers<[1], [0], [0], [1], [0, 0, 1, 1], [], []>} : vector<64x8xf32>, vector<8x32xf32>, vector<64x32xf32> -> vector<64x32xf32>
      %16 = arith.addf %11, %15 : vector<64x32xf32>
      %17 = vector.extract_strided_slice %6 {offsets = [2, 0], sizes = [64, 8], strides = [1, 1]} : vector<66x8xf32> to vector<64x8xf32>
      %c2 = arith.constant 2 : index
      %c0_13 = arith.constant 0 : index
      %c0_14 = arith.constant 0 : index
      %18 = vector.load %arg2[%c2, %c0_13, %c0_14] : memref<9x8x32xf32, #tpu.memory_space<vmem>>, vector<1x8x32xf32>
      %19 = vector.shape_cast %18 : vector<1x8x32xf32> to vector<8x32xf32>
      %cst_15 = arith.constant dense<0.000000e+00> : vector<64x32xf32>
      %20 = tpu.matmul %17, %19, %cst_15 {dimension_numbers = #tpu.dot_dimension_numbers<[1], [0], [0], [1], [0, 0, 1, 1], [], []>} : vector<64x8xf32>, vector<8x32xf32>, vector<64x32xf32> -> vector<64x32xf32>
      %21 = arith.addf %16, %20 : vector<64x32xf32>
      %c1_i32_16 = arith.constant 1 : i32
      %22 = arith.addi %arg5, %c1_i32_16 : i32
      %c0_17 = arith.constant 0 : index
      %23 = arith.index_cast %22 : i32 to index
      %c0_18 = arith.constant 0 : index
      %c0_19 = arith.constant 0 : index
      %24 = vector.load %arg1[%c0_17, %23, %c0_18, %c0_19] : memref<1x66x66x8xf32, #tpu.memory_space<vmem>>, vector<1x1x66x8xf32>
      %25 = vector.shape_cast %24 : vector<1x1x66x8xf32> to vector<66x8xf32>
      %26 = vector.extract_strided_slice %25 {offsets = [0, 0], sizes = [64, 8], strides = [1, 1]} : vector<66x8xf32> to vector<64x8xf32>
      %c3 = arith.constant 3 : index
      %c0_20 = arith.constant 0 : index
      %c0_21 = arith.constant 0 : index
      %27 = vector.load %arg2[%c3, %c0_20, %c0_21] : memref<9x8x32xf32, #tpu.memory_space<vmem>>, vector<1x8x32xf32>
      %28 = vector.shape_cast %27 : vector<1x8x32xf32> to vector<8x32xf32>
      %cst_22 = arith.constant dense<0.000000e+00> : vector<64x32xf32>
      %29 = tpu.matmul %26, %28, %cst_22 {dimension_numbers = #tpu.dot_dimension_numbers<[1], [0], [0], [1], [0, 0, 1, 1], [], []>} : vector<64x8xf32>, vector<8x32xf32>, vector<64x32xf32> -> vector<64x32xf32>
      %30 = arith.addf %21, %29 : vector<64x32xf32>
      %31 = vector.extract_strided_slice %25 {offsets = [1, 0], sizes = [64, 8], strides = [1, 1]} : vector<66x8xf32> to vector<64x8xf32>
      %c4 = arith.constant 4 : index
      %c0_23 = arith.constant 0 : index
      %c0_24 = arith.constant 0 : index
      %32 = vector.load %arg2[%c4, %c0_23, %c0_24] : memref<9x8x32xf32, #tpu.memory_space<vmem>>, vector<1x8x32xf32>
      %33 = vector.shape_cast %32 : vector<1x8x32xf32> to vector<8x32xf32>
      %cst_25 = arith.constant dense<0.000000e+00> : vector<64x32xf32>
      %34 = tpu.matmul %31, %33, %cst_25 {dimension_numbers = #tpu.dot_dimension_numbers<[1], [0], [0], [1], [0, 0, 1, 1], [], []>} : vector<64x8xf32>, vector<8x32xf32>, vector<64x32xf32> -> vector<64x32xf32>
      %35 = arith.addf %30, %34 : vector<64x32xf32>
      %36 = vector.extract_strided_slice %25 {offsets = [2, 0], sizes = [64, 8], strides = [1, 1]} : vector<66x8xf32> to vector<64x8xf32>
      %c5 = arith.constant 5 : index
      %c0_26 = arith.constant 0 : index
      %c0_27 = arith.constant 0 : index
      %37 = vector.load %arg2[%c5, %c0_26, %c0_27] : memref<9x8x32xf32, #tpu.memory_space<vmem>>, vector<1x8x32xf32>
      %38 = vector.shape_cast %37 : vector<1x8x32xf32> to vector<8x32xf32>
      %cst_28 = arith.constant dense<0.000000e+00> : vector<64x32xf32>
      %39 = tpu.matmul %36, %38, %cst_28 {dimension_numbers = #tpu.dot_dimension_numbers<[1], [0], [0], [1], [0, 0, 1, 1], [], []>} : vector<64x8xf32>, vector<8x32xf32>, vector<64x32xf32> -> vector<64x32xf32>
      %40 = arith.addf %35, %39 : vector<64x32xf32>
      %c2_i32 = arith.constant 2 : i32
      %41 = arith.addi %arg5, %c2_i32 : i32
      %c0_29 = arith.constant 0 : index
      %42 = arith.index_cast %41 : i32 to index
      %c0_30 = arith.constant 0 : index
      %c0_31 = arith.constant 0 : index
      %43 = vector.load %arg1[%c0_29, %42, %c0_30, %c0_31] : memref<1x66x66x8xf32, #tpu.memory_space<vmem>>, vector<1x1x66x8xf32>
      %44 = vector.shape_cast %43 : vector<1x1x66x8xf32> to vector<66x8xf32>
      %45 = vector.extract_strided_slice %44 {offsets = [0, 0], sizes = [64, 8], strides = [1, 1]} : vector<66x8xf32> to vector<64x8xf32>
      %c6 = arith.constant 6 : index
      %c0_32 = arith.constant 0 : index
      %c0_33 = arith.constant 0 : index
      %46 = vector.load %arg2[%c6, %c0_32, %c0_33] : memref<9x8x32xf32, #tpu.memory_space<vmem>>, vector<1x8x32xf32>
      %47 = vector.shape_cast %46 : vector<1x8x32xf32> to vector<8x32xf32>
      %cst_34 = arith.constant dense<0.000000e+00> : vector<64x32xf32>
      %48 = tpu.matmul %45, %47, %cst_34 {dimension_numbers = #tpu.dot_dimension_numbers<[1], [0], [0], [1], [0, 0, 1, 1], [], []>} : vector<64x8xf32>, vector<8x32xf32>, vector<64x32xf32> -> vector<64x32xf32>
      %49 = arith.addf %40, %48 : vector<64x32xf32>
      %50 = vector.extract_strided_slice %44 {offsets = [1, 0], sizes = [64, 8], strides = [1, 1]} : vector<66x8xf32> to vector<64x8xf32>
      %c7 = arith.constant 7 : index
      %c0_35 = arith.constant 0 : index
      %c0_36 = arith.constant 0 : index
      %51 = vector.load %arg2[%c7, %c0_35, %c0_36] : memref<9x8x32xf32, #tpu.memory_space<vmem>>, vector<1x8x32xf32>
      %52 = vector.shape_cast %51 : vector<1x8x32xf32> to vector<8x32xf32>
      %cst_37 = arith.constant dense<0.000000e+00> : vector<64x32xf32>
      %53 = tpu.matmul %50, %52, %cst_37 {dimension_numbers = #tpu.dot_dimension_numbers<[1], [0], [0], [1], [0, 0, 1, 1], [], []>} : vector<64x8xf32>, vector<8x32xf32>, vector<64x32xf32> -> vector<64x32xf32>
      %54 = arith.addf %49, %53 : vector<64x32xf32>
      %55 = vector.extract_strided_slice %44 {offsets = [2, 0], sizes = [64, 8], strides = [1, 1]} : vector<66x8xf32> to vector<64x8xf32>
      %c8 = arith.constant 8 : index
      %c0_38 = arith.constant 0 : index
      %c0_39 = arith.constant 0 : index
      %56 = vector.load %arg2[%c8, %c0_38, %c0_39] : memref<9x8x32xf32, #tpu.memory_space<vmem>>, vector<1x8x32xf32>
      %57 = vector.shape_cast %56 : vector<1x8x32xf32> to vector<8x32xf32>
      %cst_40 = arith.constant dense<0.000000e+00> : vector<64x32xf32>
      %58 = tpu.matmul %55, %57, %cst_40 {dimension_numbers = #tpu.dot_dimension_numbers<[1], [0], [0], [1], [0, 0, 1, 1], [], []>} : vector<64x8xf32>, vector<8x32xf32>, vector<64x32xf32> -> vector<64x32xf32>
      %59 = arith.addf %54, %58 : vector<64x32xf32>
      %60 = vector.broadcast %0 : vector<1x32xf32> to vector<64x32xf32>
      %61 = arith.addf %59, %60 : vector<64x32xf32>
      %cst_41 = arith.constant 0.000000e+00 : f32
      %62 = vector.broadcast %cst_41 : f32 to vector<64x32xf32>
      %63 = arith.maximumf %61, %62 : vector<64x32xf32>
      %64 = math.absf %61 : vector<64x32xf32>
      %cst_42 = arith.constant 0.000000e+00 : f32
      %65 = vector.broadcast %cst_42 : f32 to vector<64x32xf32>
      %66 = arith.subf %65, %64 : vector<64x32xf32>
      %67 = math.exp %66 : vector<64x32xf32>
      %cst_43 = arith.constant 1.000000e+00 : f32
      %68 = vector.broadcast %cst_43 : f32 to vector<64x32xf32>
      %69 = arith.addf %68, %67 : vector<64x32xf32>
      %70 = math.log %69 : vector<64x32xf32>
      %71 = arith.addf %63, %70 : vector<64x32xf32>
      %72 = math.tanh %71 : vector<64x32xf32>
      %73 = arith.mulf %61, %72 : vector<64x32xf32>
      %c0_44 = arith.constant 0 : index
      %74 = arith.index_cast %arg5 : i32 to index
      %c0_45 = arith.constant 0 : index
      %c0_46 = arith.constant 0 : index
      %75 = vector.load %arg4[%c0_44, %74, %c0_45, %c0_46] : memref<1x64x64x32xf32, #tpu.memory_space<vmem>>, vector<1x1x64x32xf32>
      %76 = vector.shape_cast %75 : vector<1x1x64x32xf32> to vector<64x32xf32>
      %77 = vector.shape_cast %73 : vector<64x32xf32> to vector<1x1x64x32xf32>
      tpu.vector_store %arg4[%c0_44, %74, %c0_45, %c0_46], %77 {strides = array<i32>} : memref<1x64x64x32xf32, #tpu.memory_space<vmem>>, vector<1x1x64x32xf32>,
    }
    %c64_i32_1 = arith.constant 64 : i32
    return
  }
  func.func @transform_0(%arg0: i32) -> (i32, i32, i32, i32) {
    %c0_i32 = arith.constant 0 : i32
    %c0_i32_0 = arith.constant 0 : i32
    %c0_i32_1 = arith.constant 0 : i32
    %c0_i32_2 = arith.constant 0 : i32
    return %arg0, %c0_i32, %c0_i32_0, %c0_i32_1 : i32, i32, i32, i32
  }
  func.func @transform_1(%arg0: i32) -> (i32, i32, i32) {
    %c0_i32 = arith.constant 0 : i32
    %c0_i32_0 = arith.constant 0 : i32
    %c0_i32_1 = arith.constant 0 : i32
    %c0_i32_2 = arith.constant 0 : i32
    return %c0_i32, %c0_i32_0, %c0_i32_1 : i32, i32, i32
  }
  func.func @transform_2(%arg0: i32) -> (i32, i32) {
    %c0_i32 = arith.constant 0 : i32
    %c0_i32_0 = arith.constant 0 : i32
    %c0_i32_1 = arith.constant 0 : i32
    return %c0_i32, %c0_i32_0 : i32, i32
  }
  func.func @transform_3(%arg0: i32) -> (i32, i32, i32, i32) {
    %c0_i32 = arith.constant 0 : i32
    %c0_i32_0 = arith.constant 0 : i32
    %c0_i32_1 = arith.constant 0 : i32
    %c0_i32_2 = arith.constant 0 : i32
    return %arg0, %c0_i32, %c0_i32_0, %c0_i32_1 : i32, i32, i32, i32
  }
}

</mosaic_0001>

<llo_original>
// kernel: tpu_custom_call.1
$region0: #{tpu_custom_call.1}
  #allocation0 [shape = 'u32[]', space=smem, size = 0x4, offset = 0x4, fixed_abs, tag = 'smem constant byte address 0x4 - core index']
  #allocation1 [shape = 'u32[72,128]{1,0:T(1,128)}', space=vmem, size = 0x9000, scoped, tag = 'internal scratch']
  %s0 = inlined_call_operand.hbm [shape: f32[8,128], index: 0, kind: input, shape index: {}]
  %s1 = inlined_call_operand.hbm [shape: f32[128,128], index: 1, kind: input, shape index: {}]
  %s2 = inlined_call_operand.hbm [shape: f32[8,128], index: 2, kind: output, shape index: {}]
  %s3 = sld [smem:[#allocation0]]
  $region26: #{tpu_custom_call.1} parent=0
    _
  %s5 = ssub.s32 1, %s3
  %s6 = scalar_select 0, %s5, %s3
  $region1: #{tpu_custom_call.1} parent=0
    #allocation2 [shape = 'u8[4096]{0}', space=vmem, size = 0x1000, scoped, tag = 'input window, operand 0, single buffered']
    #allocation3 [shape = 's32[1]{0}', space=sflag, size = 0x4, scoped, tag = 'scoped memory for tpu_custom_call.1']
    #allocation4 [shape = 's32[1]{0}', space=sflag, size = 0x4, scoped, tag = 'scoped memory for tpu_custom_call.1']
    #allocation5 [shape = 'u8[65536]{0}', space=vmem, size = 0x10000, scoped, tag = 'input window, operand 1, single buffered']
    #allocation6 [shape = 's32[1]{0}', space=sflag, size = 0x4, scoped, tag = 'scoped memory for tpu_custom_call.1']
    #allocation7 [shape = 'u8[4096]{0}', space=vmem, size = 0x1000, scoped, tag = 'output window, operand 0, single buffered']
    %7 = vsyncpa [#allocation3], 0
    %8 = vsyncpa [#allocation6], 0
    %9 = vsyncpa [#allocation4], 0
    // Predicated region
    $region2: #{tpu_custom_call.1} parent=1 // pred_check
      _
    $region3: #{tpu_custom_call.1} parent=1 // pred_check_branch
      %11 = sbr.rel (0) target = $region5
    $region4: #{tpu_custom_call.1} parent=1 // pred_region
      %13 = vsyncadd [#allocation3], 0
      %s15 = sshll.u32 %s0, 4
      %s16 = int_to_ptr.hbm [resolvable:$true] %s15
      %s17 = sshll.u32 [#allocation2], 4
      %s18 = int_to_ptr.vmem [resolvable:$true] %s17
      %20 = dma.hbm_to_vmem [thread:$0]  %s16, 128, %s18, [#allocation3]
    $region5: #{tpu_custom_call.1} parent=1 // pred_fallthru
      _
    // Predicated region
    $region6: #{tpu_custom_call.1} parent=1 // pred_check
      _
    $region7: #{tpu_custom_call.1} parent=1 // pred_check_branch
      %22 = sbr.rel (0) target = $region9
    $region8: #{tpu_custom_call.1} parent=1 // pred_region
      %24 = vsyncadd [#allocation6], 0
      %s25 = sshll.u32 %s1, 4
      %s26 = int_to_ptr.hbm [resolvable:$true] %s25
      %s27 = sshll.u32 [#allocation5], 4
      %s28 = int_to_ptr.vmem [resolvable:$true] %s27
      %33 = dma.hbm_to_vmem [thread:$0]  %s26, 2048, %s28, [#allocation6], 128, 128, 8
    $region9: #{tpu_custom_call.1} parent=1 // pred_fallthru
      _
    // Predicated region
    $region10: #{tpu_custom_call.1} parent=1 // pred_check
      _
    $region11: #{tpu_custom_call.1} parent=1 // pred_check_branch
      %35 = sbr.rel (0) target = $region13
    $region12: #{tpu_custom_call.1} parent=1 // pred_region
      %37 = dma.done [#allocation3], 128
    $region13: #{tpu_custom_call.1} parent=1 // pred_fallthru
      _
    // Predicated region
    $region14: #{tpu_custom_call.1} parent=1 // pred_check
      _
    $region15: #{tpu_custom_call.1} parent=1 // pred_check_branch
      %39 = sbr.rel (0) target = $region17
    $region16: #{tpu_custom_call.1} parent=1 // pred_region
      %41 = dma.done [#allocation6], 2048
    $region17: #{tpu_custom_call.1} parent=1 // pred_fallthru
      _
    %v42 = vld [vmem:[#allocation2] sm:$0xff]
    %v43 = vld [vmem:[#allocation5] sm:$0xff]
    %v44 = vld [vmem:[#allocation5 + $0x8] sm:$0xff]
    %v45 = vld [vmem:[#allocation5 + $0x10] sm:$0xff]
    %v46 = vld [vmem:[#allocation5 + $0x18] sm:$0xff]
    %v47 = vld [vmem:[#allocation5 + $0x20] sm:$0xff]
    %v48 = vld [vmem:[#allocation5 + $0x28] sm:$0xff]
    %v49 = vld [vmem:[#allocation5 + $0x30] sm:$0xff]
    %v50 = vld [vmem:[#allocation5 + $0x38] sm:$0xff]
    %v51 = vld [vmem:[#allocation5 + $0x40] sm:$0xff]
    %v52 = vld [vmem:[#allocation5 + $0x48] sm:$0xff]
    %v53 = vld [vmem:[#allocation5 + $0x50] sm:$0xff]
    %v54 = vld [vmem:[#allocation5 + $0x58] sm:$0xff]
    %v55 = vld [vmem:[#allocation5 + $0x60] sm:$0xff]
    %v56 = vld [vmem:[#allocation5 + $0x68] sm:$0xff]
    %v57 = vld [vmem:[#allocation5 + $0x70] sm:$0xff]
    %v58 = vld [vmem:[#allocation5 + $0x78] sm:$0xff]
    %v59 = vand.u32 %v58, 4294901760
    %60 = vmatpush.msra.mxu0 %v59
    %v61 = vand.u32 %v57, 4294901760
    %62 = vmatpush.msra.mxu0 %v61
    %v63 = vand.u32 %v56, 4294901760
    %64 = vmatpush.msra.mxu0 %v63
    %v65 = vand.u32 %v55, 4294901760
    %66 = vmatpush.msra.mxu0 %v65
    %v67 = vand.u32 %v54, 4294901760
    %68 = vmatpush.msra.mxu0 %v67
    %v69 = vand.u32 %v53, 4294901760
    %70 = vmatpush.msra.mxu0 %v69
    %v71 = vand.u32 %v52, 4294901760
    %72 = vmatpush.msra.mxu0 %v71
    %v73 = vand.u32 %v51, 4294901760
    %74 = vmatpush.msra.mxu0 %v73
    %v75 = vand.u32 %v50, 4294901760
    %76 = vmatpush.msra.mxu0 %v75
    %v77 = vand.u32 %v49, 4294901760
    %78 = vmatpush.msra.mxu0 %v77
    %v79 = vand.u32 %v48, 4294901760
    %80 = vmatpush.msra.mxu0 %v79
    %v81 = vand.u32 %v47, 4294901760
    %82 = vmatpush.msra.mxu0 %v81
    %v83 = vand.u32 %v46, 4294901760
    %84 = vmatpush.msra.mxu0 %v83
    %v85 = vand.u32 %v45, 4294901760
    %86 = vmatpush.msra.mxu0 %v85
    %v87 = vand.u32 %v44, 4294901760
    %88 = vmatpush.msra.mxu0 %v87
    %v89 = vand.u32 %v43, 4294901760
    %90 = vmatpush.msra.mxu0 %v89
    %v91 = vand.u32 %v42, 4294901760
    %v92 = vsub.f32 %v42, %v91
    %v93 = vand.u32 %v92, 4294901760
    %v94 = vsub.f32 %v92, %v93
    %v95 = vand.u32 %v94, 4294901760
    %96 = vmatmul.f32.gmra.mxu0 %v95
    %v97 = vpop.f32.mrf.mxu0
    %v98 = vadd.f32 0.0, %v97
    %99 = vdwg.mxu0
    %v100 = vand.u32 %v58, 4294901760
    %v101 = vsub.f32 %v58, %v100
    %v102 = vand.u32 %v101, 4294901760
    %v103 = vsub.f32 %v101, %v102
    %v104 = vand.u32 %v103, 4294901760
    %105 = vmatpush.msra.mxu0 %v104
    %v106 = vand.u32 %v57, 4294901760
    %v107 = vsub.f32 %v57, %v106
    %v108 = vand.u32 %v107, 4294901760
    %v109 = vsub.f32 %v107, %v108
    %v110 = vand.u32 %v109, 4294901760
    %111 = vmatpush.msra.mxu0 %v110
    %v112 = vand.u32 %v56, 4294901760
    %v113 = vsub.f32 %v56, %v112
    %v114 = vand.u32 %v113, 4294901760
    %v115 = vsub.f32 %v113, %v114
    %v116 = vand.u32 %v115, 4294901760
    %117 = vmatpush.msra.mxu0 %v116
    %v118 = vand.u32 %v55, 4294901760
    %v119 = vsub.f32 %v55, %v118
    %v120 = vand.u32 %v119, 4294901760
    %v121 = vsub.f32 %v119, %v120
    %v122 = vand.u32 %v121, 4294901760
    %123 = vmatpush.msra.mxu0 %v122
    %v124 = vand.u32 %v54, 4294901760
    %v125 = vsub.f32 %v54, %v124
    %v126 = vand.u32 %v125, 4294901760
    %v127 = vsub.f32 %v125, %v126
    %v128 = vand.u32 %v127, 4294901760
    %129 = vmatpush.msra.mxu0 %v128
    %v130 = vand.u32 %v53, 4294901760
    %v131 = vsub.f32 %v53, %v130
    %v132 = vand.u32 %v131, 4294901760
    %v133 = vsub.f32 %v131, %v132
    %v134 = vand.u32 %v133, 4294901760
    %135 = vmatpush.msra.mxu0 %v134
    %v136 = vand.u32 %v52, 4294901760
    %v137 = vsub.f32 %v52, %v136
    %v138 = vand.u32 %v137, 4294901760
    %v139 = vsub.f32 %v137, %v138
    %v140 = vand.u32 %v139, 4294901760
    %141 = vmatpush.msra.mxu0 %v140
    %v142 = vand.u32 %v51, 4294901760
    %v143 = vsub.f32 %v51, %v142
    %v144 = vand.u32 %v143, 4294901760
    %v145 = vsub.f32 %v143, %v144
    %v146 = vand.u32 %v145, 4294901760
    %147 = vmatpush.msra.mxu0 %v146
    %v148 = vand.u32 %v50, 4294901760
    %v149 = vsub.f32 %v50, %v148
    %v150 = vand.u32 %v149, 4294901760
    %v151 = vsub.f32 %v149, %v150
    %v152 = vand.u32 %v151, 4294901760
    %153 = vmatpush.msra.mxu0 %v152
    %v154 = vand.u32 %v49, 4294901760
    %v155 = vsub.f32 %v49, %v154
    %v156 = vand.u32 %v155, 4294901760
    %v157 = vsub.f32 %v155, %v156
    %v158 = vand.u32 %v157, 4294901760
    %159 = vmatpush.msra.mxu0 %v158
    %v160 = vand.u32 %v48, 4294901760
    %v161 = vsub.f32 %v48, %v160
    %v162 = vand.u32 %v161, 4294901760
    %v163 = vsub.f32 %v161, %v162
    %v164 = vand.u32 %v163, 4294901760
    %165 = vmatpush.msra.mxu0 %v164
    %v166 = vand.u32 %v47, 4294901760
    %v167 = vsub.f32 %v47, %v166
    %v168 = vand.u32 %v167, 4294901760
    %v169 = vsub.f32 %v167, %v168
    %v170 = vand.u32 %v169, 4294901760
    %171 = vmatpush.msra.mxu0 %v170
    %v172 = vand.u32 %v46, 4294901760
    %v173 = vsub.f32 %v46, %v172
    %v174 = vand.u32 %v173, 4294901760
    %v175 = vsub.f32 %v173, %v174
    %v176 = vand.u32 %v175, 4294901760
    %177 = vmatpush.msra.mxu0 %v176
    %v178 = vand.u32 %v45, 4294901760
    %v179 = vsub.f32 %v45, %v178
    %v180 = vand.u32 %v179, 4294901760
    %v181 = vsub.f32 %v179, %v180
    %v182 = vand.u32 %v181, 4294901760
    %183 = vmatpush.msra.mxu0 %v182
    %v184 = vand.u32 %v44, 4294901760
    %v185 = vsub.f32 %v44, %v184
    %v186 = vand.u32 %v185, 4294901760
    %v187 = vsub.f32 %v185, %v186
    %v188 = vand.u32 %v187, 4294901760
    %189 = vmatpush.msra.mxu0 %v188
    %v190 = vand.u32 %v43, 4294901760
    %v191 = vsub.f32 %v43, %v190
    %v192 = vand.u32 %v191, 4294901760
    %v193 = vsub.f32 %v191, %v192
    %v194 = vand.u32 %v193, 4294901760
    %195 = vmatpush.msra.mxu0 %v194
    %v196 = vand.u32 %v42, 4294901760
    %197 = vmatmul.f32.gmra.mxu0 %v196
    %v198 = vpop.f32.mrf.mxu0
    %v199 = vadd.f32 %v98, %v198
    %200 = vdwg.mxu0
    %v201 = vand.u32 %v58, 4294901760
    %v202 = vsub.f32 %v58, %v201
    %203 = vmatpush.msra.mxu0 %v202
    %v204 = vand.u32 %v57, 4294901760
    %v205 = vsub.f32 %v57, %v204
    %206 = vmatpush.msra.mxu0 %v205
    %v207 = vand.u32 %v56, 4294901760
    %v208 = vsub.f32 %v56, %v207
    %209 = vmatpush.msra.mxu0 %v208
    %v210 = vand.u32 %v55, 4294901760
    %v211 = vsub.f32 %v55, %v210
    %212 = vmatpush.msra.mxu0 %v211
    %v213 = vand.u32 %v54, 4294901760
    %v214 = vsub.f32 %v54, %v213
    %215 = vmatpush.msra.mxu0 %v214
    %v216 = vand.u32 %v53, 4294901760
    %v217 = vsub.f32 %v53, %v216
    %218 = vmatpush.msra.mxu0 %v217
    %v219 = vand.u32 %v52, 4294901760
    %v220 = vsub.f32 %v52, %v219
    %221 = vmatpush.msra.mxu0 %v220
    %v222 = vand.u32 %v51, 4294901760
    %v223 = vsub.f32 %v51, %v222
    %224 = vmatpush.msra.mxu0 %v223
    %v225 = vand.u32 %v50, 4294901760
    %v226 = vsub.f32 %v50, %v225
    %227 = vmatpush.msra.mxu0 %v226
    %v228 = vand.u32 %v49, 4294901760
    %v229 = vsub.f32 %v49, %v228
    %230 = vmatpush.msra.mxu0 %v229
    %v231 = vand.u32 %v48, 4294901760
    %v232 = vsub.f32 %v48, %v231
    %233 = vmatpush.msra.mxu0 %v232
    %v234 = vand.u32 %v47, 4294901760
    %v235 = vsub.f32 %v47, %v234
    %236 = vmatpush.msra.mxu0 %v235
    %v237 = vand.u32 %v46, 4294901760
    %v238 = vsub.f32 %v46, %v237
    %239 = vmatpush.msra.mxu0 %v238
    %v240 = vand.u32 %v45, 4294901760
    %v241 = vsub.f32 %v45, %v240
    %242 = vmatpush.msra.mxu0 %v241
    %v243 = vand.u32 %v44, 4294901760
    %v244 = vsub.f32 %v44, %v243
    %245 = vmatpush.msra.mxu0 %v244
    %v246 = vand.u32 %v43, 4294901760
    %v247 = vsub.f32 %v43, %v246
    %248 = vmatpush.msra.mxu0 %v247
    %v249 = vand.u32 %v42, 4294901760
    %v250 = vsub.f32 %v42, %v249
    %251 = vmatmul.f32.gmra.mxu0 %v250
    %v252 = vpop.f32.mrf.mxu0
    %v253 = vadd.f32 %v199, %v252
    %254 = vdwg.mxu0
    %v255 = vand.u32 %v58, 4294901760
    %256 = vmatpush.msra.mxu0 %v255
    %v257 = vand.u32 %v57, 4294901760
    %258 = vmatpush.msra.mxu0 %v257
    %v259 = vand.u32 %v56, 4294901760
    %260 = vmatpush.msra.mxu0 %v259
    %v261 = vand.u32 %v55, 4294901760
    %262 = vmatpush.msra.mxu0 %v261
    %v263 = vand.u32 %v54, 4294901760
    %264 = vmatpush.msra.mxu0 %v263
    %v265 = vand.u32 %v53, 4294901760
    %266 = vmatpush.msra.mxu0 %v265
    %v267 = vand.u32 %v52, 4294901760
    %268 = vmatpush.msra.mxu0 %v267
    %v269 = vand.u32 %v51, 4294901760
    %270 = vmatpush.msra.mxu0 %v269
    %v271 = vand.u32 %v50, 4294901760
    %272 = vmatpush.msra.mxu0 %v271
    %v273 = vand.u32 %v49, 4294901760
    %274 = vmatpush.msra.mxu0 %v273
    %v275 = vand.u32 %v48, 4294901760
    %276 = vmatpush.msra.mxu0 %v275
    %v277 = vand.u32 %v47, 4294901760
    %278 = vmatpush.msra.mxu0 %v277
    %v279 = vand.u32 %v46, 4294901760
    %280 = vmatpush.msra.mxu0 %v279
    %v281 = vand.u32 %v45, 4294901760
    %282 = vmatpush.msra.mxu0 %v281
    %v283 = vand.u32 %v44, 4294901760
    %284 = vmatpush.msra.mxu0 %v283
    %v285 = vand.u32 %v43, 4294901760
    %286 = vmatpush.msra.mxu0 %v285
    %v287 = vand.u32 %v42, 4294901760
    %v288 = vsub.f32 %v42, %v287
    %v289 = vand.u32 %v288, 4294901760
    %290 = vmatmul.f32.gmra.mxu0 %v289
    %v291 = vpop.f32.mrf.mxu0
    %v292 = vadd.f32 %v253, %v291
    %293 = vdwg.mxu0
    %v294 = vand.u32 %v58, 4294901760
    %v295 = vsub.f32 %v58, %v294
    %v296 = vand.u32 %v295, 4294901760
    %297 = vmatpush.msra.mxu0 %v296
    %v298 = vand.u32 %v57, 4294901760
    %v299 = vsub.f32 %v57, %v298
    %v300 = vand.u32 %v299, 4294901760
    %301 = vmatpush.msra.mxu0 %v300
    %v302 = vand.u32 %v56, 4294901760
    %v303 = vsub.f32 %v56, %v302
    %v304 = vand.u32 %v303, 4294901760
    %305 = vmatpush.msra.mxu0 %v304
    %v306 = vand.u32 %v55, 4294901760
    %v307 = vsub.f32 %v55, %v306
    %v308 = vand.u32 %v307, 4294901760
    %309 = vmatpush.msra.mxu0 %v308
    %v310 = vand.u32 %v54, 4294901760
    %v311 = vsub.f32 %v54, %v310
    %v312 = vand.u32 %v311, 4294901760
    %313 = vmatpush.msra.mxu0 %v312
    %v314 = vand.u32 %v53, 4294901760
    %v315 = vsub.f32 %v53, %v314
    %v316 = vand.u32 %v315, 4294901760
    %317 = vmatpush.msra.mxu0 %v316
    %v318 = vand.u32 %v52, 4294901760
    %v319 = vsub.f32 %v52, %v318
    %v320 = vand.u32 %v319, 4294901760
    %321 = vmatpush.msra.mxu0 %v320
    %v322 = vand.u32 %v51, 4294901760
    %v323 = vsub.f32 %v51, %v322
    %v324 = vand.u32 %v323, 4294901760
    %325 = vmatpush.msra.mxu0 %v324
    %v326 = vand.u32 %v50, 4294901760
    %v327 = vsub.f32 %v50, %v326
    %v328 = vand.u32 %v327, 4294901760
    %329 = vmatpush.msra.mxu0 %v328
    %v330 = vand.u32 %v49, 4294901760
    %v331 = vsub.f32 %v49, %v330
    %v332 = vand.u32 %v331, 4294901760
    %333 = vmatpush.msra.mxu0 %v332
    %v334 = vand.u32 %v48, 4294901760
    %v335 = vsub.f32 %v48, %v334
    %v336 = vand.u32 %v335, 4294901760
    %337 = vmatpush.msra.mxu0 %v336
    %v338 = vand.u32 %v47, 4294901760
    %v339 = vsub.f32 %v47, %v338
    %v340 = vand.u32 %v339, 4294901760
    %341 = vmatpush.msra.mxu0 %v340
    %v342 = vand.u32 %v46, 4294901760
    %v343 = vsub.f32 %v46, %v342
    %v344 = vand.u32 %v343, 4294901760
    %345 = vmatpush.msra.mxu0 %v344
    %v346 = vand.u32 %v45, 4294901760
    %v347 = vsub.f32 %v45, %v346
    %v348 = vand.u32 %v347, 4294901760
    %349 = vmatpush.msra.mxu0 %v348
    %v350 = vand.u32 %v44, 4294901760
    %v351 = vsub.f32 %v44, %v350
    %v352 = vand.u32 %v351, 4294901760
    %353 = vmatpush.msra.mxu0 %v352
    %v354 = vand.u32 %v43, 4294901760
    %v355 = vsub.f32 %v43, %v354
    %v356 = vand.u32 %v355, 4294901760
    %357 = vmatpush.msra.mxu0 %v356
    %v358 = vand.u32 %v42, 4294901760
    %359 = vmatmul.f32.gmra.mxu0 %v358
    %v360 = vpop.f32.mrf.mxu0
    %v361 = vadd.f32 %v292, %v360
    %362 = vdwg.mxu0
    %v363 = vand.u32 %v58, 4294901760
    %364 = vmatpush.msra.mxu0 %v363
    %v365 = vand.u32 %v57, 4294901760
    %366 = vmatpush.msra.mxu0 %v365
    %v367 = vand.u32 %v56, 4294901760
    %368 = vmatpush.msra.mxu0 %v367
    %v369 = vand.u32 %v55, 4294901760
    %370 = vmatpush.msra.mxu0 %v369
    %v371 = vand.u32 %v54, 4294901760
    %372 = vmatpush.msra.mxu0 %v371
    %v373 = vand.u32 %v53, 4294901760
    %374 = vmatpush.msra.mxu0 %v373
    %v375 = vand.u32 %v52, 4294901760
    %376 = vmatpush.msra.mxu0 %v375
    %v377 = vand.u32 %v51, 4294901760
    %378 = vmatpush.msra.mxu0 %v377
    %v379 = vand.u32 %v50, 4294901760
    %380 = vmatpush.msra.mxu0 %v379
    %v381 = vand.u32 %v49, 4294901760
    %382 = vmatpush.msra.mxu0 %v381
    %v383 = vand.u32 %v48, 4294901760
    %384 = vmatpush.msra.mxu0 %v383
    %v385 = vand.u32 %v47, 4294901760
    %386 = vmatpush.msra.mxu0 %v385
    %v387 = vand.u32 %v46, 4294901760
    %388 = vmatpush.msra.mxu0 %v387
    %v389 = vand.u32 %v45, 4294901760
    %390 = vmatpush.msra.mxu0 %v389
    %v391 = vand.u32 %v44, 4294901760
    %392 = vmatpush.msra.mxu0 %v391
    %v393 = vand.u32 %v43, 4294901760
    %394 = vmatpush.msra.mxu0 %v393
    %v395 = vand.u32 %v42, 4294901760
    %396 = vmatmul.f32.gmra.mxu0 %v395
    %v397 = vpop.f32.mrf.mxu0
    %v398 = vadd.f32 %v361, %v397
    %399 = vdwg.mxu0
    %400 = vst [vmem:[#allocation7] sm:$0xff] %v398
    // Predicated region
    $region18: #{tpu_custom_call.1} parent=1 // pred_check
      _
    $region19: #{tpu_custom_call.1} parent=1 // pred_check_branch
      %402 = sbr.rel (0) target = $region21
    $region20: #{tpu_custom_call.1} parent=1 // pred_region
      %404 = vsyncadd [#allocation4], 0
      %s406 = sshll.u32 [#allocation7], 4
      %s407 = int_to_ptr.vmem [resolvable:$true] %s406
      %s408 = sshll.u32 %s2, 4
      %s409 = int_to_ptr.hbm [resolvable:$true] %s408
      %411 = dma.vmem_to_hbm [thread:$0]  %s407, 128, %s409, [#allocation4]
    $region21: #{tpu_custom_call.1} parent=1 // pred_fallthru
      _
    // Predicated region
    $region22: #{tpu_custom_call.1} parent=1 // pred_check
      _
    $region23: #{tpu_custom_call.1} parent=1 // pred_check_branch
      %413 = sbr.rel (0) target = $region25
    $region24: #{tpu_custom_call.1} parent=1 // pred_region
      %415 = dma.done [#allocation4], 128
    $region25: #{tpu_custom_call.1} parent=1 // pred_fallthru
      _
    %416 = vsyncpa [#allocation3], 1
    %417 = vsyncpa [#allocation6], 1
    %418 = vsyncpa [#allocation4], 1

// kernel: tpu_custom_call.1
$region0: #{tpu_custom_call.1}
  #allocation0 [shape = 'u32[]', space=smem, size = 0x4, offset = 0x4, fixed_abs, tag = 'smem constant byte address 0x4 - core index']
  #allocation1 [shape = 'u32[72,128]{1,0:T(1,128)}', space=vmem, size = 0x9000, scoped, tag = 'internal scratch']
  %s0 = inlined_call_operand.vmem [shape: f32[2,66,66,8], index: 0, kind: input, shape index: {}]
  %s1 = inlined_call_operand.vmem [shape: f32[9,8,32], index: 1, kind: input, shape index: {}]
  %s2 = inlined_call_operand.vmem [shape: f32[1,32], index: 2, kind: input, shape index: {}]
  %s3 = inlined_call_operand.vmem [shape: f32[2,64,64,32], index: 3, kind: output, shape index: {}]
  %s4 = sld [smem:[#allocation0]]
  $region52: #{tpu_custom_call.1} parent=0
    _
  %s6 = ssub.s32 1, %s4
  %s7 = scalar_select 0, %s6, %s4
  loop: start=0, step=1, limit=4
  $region2: #{tpu_custom_call.1} parent=0 // loop_pre_header
    _
  $region3: #{tpu_custom_call.1} parent=0 // loop_header
    %s9 = sphi 0, %s13
    %p10 = scmp.ge.s32.totalorder %s9, 4
    %s19 = sphi 0, %s21
    %s22 = sphi 0, %s19
    %s23 = sphi 0, %s22
    %s39 = sphi 0, %s23
    %s43 = sphi 0, %s43
    %s45 = sphi 0, %s43
    %s46 = sphi 0, %s45
    %s60 = sphi 0, %s46
    %s64 = sphi 0, %s64
    %s66 = sphi 0, %s64
    %s67 = sphi 0, %s66
    %s81 = sphi 0, %s67
    %s87 = sphi 0, %s89
    %s90 = sphi 0, %s87
    %s91 = sphi 0, %s90
    %s107 = sphi 0, %s91
  $region4: #{tpu_custom_call.1} parent=0 // loop_header_branch
    %12 = sbr.rel (%p10) target = $region8
  $region5: #{tpu_custom_call.1} parent=0 // loop_body
    %s14 = ssub.s32 %s9, 1
    %s15 = ssub.s32 %s9, 2
    %s16 = sadd.s32 %s9, 1
    %s17 = ssub.s32 %s9, %s16
    %p18 = scmp.eq.s32.totalorder %s17, 0
    %s20 = sadd.s32 %s19, 1
    %s21 = scalar_select %p18, %s19, %s20
    %p24 = pneg %p18
    %p25 = scmp.eq.s32.totalorder %s9, 1
    %p26 = por %p24, %p25
    %p27 = scmp.ne.s32.totalorder %s19, %s22
    %p28 = scmp.eq.s32.totalorder %s9, 0
    %p29 = por %p27, %p28
    %p30 = scmp.ne.s32.totalorder %s19, %s22
    %p31 = scmp.eq.s32.totalorder %s14, 1
    %p32 = por %p30, %p31
    %p33 = scmp.ne.s32.totalorder %s22, %s23
    %p34 = scmp.eq.s32.totalorder %s14, 0
    %p35 = por %p33, %p34
    %p36 = scmp.ne.s32.totalorder %s22, %s23
    %p37 = scmp.eq.s32.totalorder %s15, 1
    %p38 = por %p36, %p37
    %p40 = scmp.ne.s32.totalorder %s23, %s39
    %p41 = scmp.eq.s32.totalorder %s15, 0
    %p42 = por %p40, %p41
    %s44 = sadd.s32 %s43, 1
    %p47 = scmp.eq.s32.totalorder %s9, 1
    %p48 = scmp.ne.s32.totalorder %s43, %s45
    %p49 = scmp.eq.s32.totalorder %s9, 0
    %p50 = por %p48, %p49
    %p51 = scmp.ne.s32.totalorder %s43, %s45
    %p52 = scmp.eq.s32.totalorder %s14, 1
    %p53 = por %p51, %p52
    %p54 = scmp.ne.s32.totalorder %s45, %s46
    %p55 = scmp.eq.s32.totalorder %s14, 0
    %p56 = por %p54, %p55
    %p57 = scmp.ne.s32.totalorder %s45, %s46
    %p58 = scmp.eq.s32.totalorder %s15, 1
    %p59 = por %p57, %p58
    %p61 = scmp.ne.s32.totalorder %s46, %s60
    %p62 = scmp.eq.s32.totalorder %s15, 0
    %p63 = por %p61, %p62
    %s65 = sadd.s32 %s64, 1
    %p68 = scmp.eq.s32.totalorder %s9, 1
    %p69 = scmp.ne.s32.totalorder %s64, %s66
    %p70 = scmp.eq.s32.totalorder %s9, 0
    %p71 = por %p69, %p70
    %p72 = scmp.ne.s32.totalorder %s64, %s66
    %p73 = scmp.eq.s32.totalorder %s14, 1
    %p74 = por %p72, %p73
    %p75 = scmp.ne.s32.totalorder %s66, %s67
    %p76 = scmp.eq.s32.totalorder %s14, 0
    %p77 = por %p75, %p76
    %p78 = scmp.ne.s32.totalorder %s66, %s67
    %p79 = scmp.eq.s32.totalorder %s15, 1
    %p80 = por %p78, %p79
    %p82 = scmp.ne.s32.totalorder %s67, %s81
    %p83 = scmp.eq.s32.totalorder %s15, 0
    %p84 = por %p82, %p83
    %s85 = ssub.s32 %s9, %s16
    %p86 = scmp.eq.s32.totalorder %s85, 0
    %s88 = sadd.s32 %s87, 1
    %s89 = scalar_select %p86, %s87, %s88
    %p92 = pneg %p86
    %p93 = scmp.eq.s32.totalorder %s9, 1
    %p94 = por %p92, %p93
    %p95 = scmp.ne.s32.totalorder %s87, %s90
    %p96 = scmp.eq.s32.totalorder %s9, 0
    %p97 = por %p95, %p96
    %p98 = scmp.ne.s32.totalorder %s87, %s90
    %p99 = scmp.eq.s32.totalorder %s14, 1
    %p100 = por %p98, %p99
    %p101 = scmp.ne.s32.totalorder %s90, %s91
    %p102 = scmp.eq.s32.totalorder %s14, 0
    %p103 = por %p101, %p102
    %p104 = scmp.ne.s32.totalorder %s90, %s91
    %p105 = scmp.eq.s32.totalorder %s15, 1
    %p106 = por %p104, %p105
    %p108 = scmp.ne.s32.totalorder %s91, %s107
    %p109 = scmp.eq.s32.totalorder %s15, 0
    %p110 = por %p108, %p109
    %p111 = scmp.le.s32.totalorder 1, %s9
    %p112 = scmp.lt.s32.totalorder %s9, 3
    %p113 = pnand %p111, %p112
    %p114 = pneg %p113
    // Predicated region
    $region9: #{tpu_custom_call.1} parent=5 // pred_check
      _
    $region10: #{tpu_custom_call.1} parent=5 // pred_check_branch
      %116 = sbr.rel (%p113) target = $region12
    $region11: #{tpu_custom_call.1} parent=5 // pred_region
      %s117 = ssub.s32 %s9, 1
      // Predicated region
      $region13: #{tpu_custom_call.1} parent=11 // pred_check
        %p118 = pneg %p56
      $region14: #{tpu_custom_call.1} parent=11 // pred_check_branch
        %120 = sbr.rel (%p118) target = $region16
      $region15: #{tpu_custom_call.1} parent=11 // pred_region
        _
      $region16: #{tpu_custom_call.1} parent=11 // pred_fallthru
        _
      // Predicated region
      $region17: #{tpu_custom_call.1} parent=11 // pred_check
        %p121 = pneg %p77
      $region18: #{tpu_custom_call.1} parent=11 // pred_check_branch
        %123 = sbr.rel (%p121) target = $region20
      $region19: #{tpu_custom_call.1} parent=11 // pred_region
        _
      $region20: #{tpu_custom_call.1} parent=11 // pred_fallthru
        _
    $region12: #{tpu_custom_call.1} parent=5 // pred_fallthru
      _
    %p124 = scmp.lt.s32.totalorder %s9, 2
    // Predicated region
    $region21: #{tpu_custom_call.1} parent=5 // pred_check
      %p125 = pneg %p124
    $region22: #{tpu_custom_call.1} parent=5 // pred_check_branch
      %127 = sbr.rel (%p125) target = $region24
    $region23: #{tpu_custom_call.1} parent=5 // pred_region
      // Predicated region
      $region25: #{tpu_custom_call.1} parent=23 // pred_check
        %p128 = pneg %p29
      $region26: #{tpu_custom_call.1} parent=23 // pred_check_branch
        %130 = sbr.rel (%p128) target = $region28
      $region27: #{tpu_custom_call.1} parent=23 // pred_region
        %p131 = scmp.lt.s32.totalorder %s9, 1
        %s132 = scalar_select %p131, %s9, 1
        %s133 = smul.addr %s132, 594
        %s134 = smul.addr %s133, 8
        %s135 = scalar_lea.vmem %s0, %s134
      $region28: #{tpu_custom_call.1} parent=23 // pred_fallthru
        _
    $region24: #{tpu_custom_call.1} parent=5 // pred_fallthru
      _
    %p136 = scmp.le.s32.totalorder 1, %s9
    %p137 = scmp.lt.s32.totalorder %s9, 3
    %p138 = pnand %p136, %p137
    %p139 = pneg %p138
    // Predicated region
    $region29: #{tpu_custom_call.1} parent=5 // pred_check
      _
    $region30: #{tpu_custom_call.1} parent=5 // pred_check_branch
      %141 = sbr.rel (%p138) target = $region32
    $region31: #{tpu_custom_call.1} parent=5 // pred_region
      %s142 = ssub.s32 %s9, 1
      %p143 = scmp.lt.s32.totalorder %s14, 1
      %s144 = scalar_select %p143, %s14, 1
      %s145 = smul.addr %s144, 594
      %s146 = smul.addr %s145, 8
      %s147 = scalar_lea.vmem %s0, %s146
      %p148 = pneg %p35
      %p149 = pneg %p32
      %p150 = pneg %p56
      %p151 = pneg %p53
      %p152 = pneg %p77
      %p153 = pneg %p74
      %p154 = pneg %p103
      %p155 = pneg %p100
      %p156 = scmp.lt.s32.totalorder %s14, 1
      %s157 = scalar_select %p156, %s14, 1
      %s158 = smul.addr %s157, 512
      %s159 = smul.addr %s158, 8
      %s160 = scalar_lea.vmem %s3, %s159
      %p161 = scmp.lt.s32.totalorder %s14, 1
      %s162 = scalar_select %p161, %s14, 1
      %s163 = smul.addr %s162, 594
      %s164 = smul.addr %s163, 8
      %s165 = scalar_lea.vmem %s0, %s164
      %p166 = scmp.lt.s32.totalorder %s14, 1
      %s167 = scalar_select %p166, %s14, 1
      %s168 = smul.addr %s167, 512
      %s169 = smul.addr %s168, 8
      %s170 = scalar_lea.vmem %s3, %s169
      %v171 = vld [vmem:[%s2] sm:$0x1]
      loop: start=0, step=1, limit=64
      $region33: #{tpu_custom_call.1} parent=31 // loop_pre_header
        _
      $region34: #{tpu_custom_call.1} parent=31 // loop_header
        %s173 = sphi 0, %s177
        %p174 = scmp.ge.s32.totalorder %s173, 64
      $region35: #{tpu_custom_call.1} parent=31 // loop_header_branch
        %176 = sbr.rel (%p174) target = $region39
      $region36: #{tpu_custom_call.1} parent=31 // loop_body
        %s178 = smul.u32 %s173, 72
        %s179 = scalar_lea.vmem %s165, %s178
        %v180 = vld [vmem:[%s179] sm:$0xff]
        %v181 = vld [vmem:[%s179 + $0x8] sm:$0xff]
        %v182 = vld [vmem:[%s179 + $0x10] sm:$0xff]
        %v183 = vld [vmem:[%s179 + $0x18] sm:$0xff]
        %v184 = vld [vmem:[%s179 + $0x20] sm:$0xff]
        %v185 = vld [vmem:[%s179 + $0x28] sm:$0xff]
        %v186 = vld [vmem:[%s179 + $0x30] sm:$0xff]
        %v187 = vld [vmem:[%s179 + $0x38] sm:$0xff]
        %v188 = vld [vmem:[%s179 + $0x40] sm:$0x3]
        %v189 = vld [vmem:[%s1] sm:$0xff]
        %s190 = scalar_lea.vmem %s1, 8
        %v191 = vld [vmem:[%s190] sm:$0xff]
        %vm201 = vcmask 1046528
        %v202 = vrot.slane %v180, 1
        %v203 = vrot.slane %v181, 1
        %v204 = vsel %vm201, %v202, %v203
        %v205 = vrot.slane %v182, 1
        %v206 = vsel %vm201, %v203, %v205
        %v207 = vrot.slane %v183, 1
        %v208 = vsel %vm201, %v205, %v207
        %v209 = vrot.slane %v184, 1
        %v210 = vsel %vm201, %v207, %v209
        %v211 = vrot.slane %v185, 1
        %v212 = vsel %vm201, %v209, %v211
        %v213 = vrot.slane %v186, 1
        %v214 = vsel %vm201, %v211, %v213
        %v215 = vrot.slane %v187, 1
        %v216 = vsel %vm201, %v213, %v215
        %v217 = vrot.slane %v188, 1
        %v218 = vsel %vm201, %v215, %v217
        %vm219 = vcmask 64512
        %v220 = vsel %vm219, %v204, 0
        %v222 = vsel %vm219, %v206, 0
        %v224 = vsel %vm219, %v208, 0
        %v226 = vsel %vm219, %v210, 0
        %v228 = vsel %vm219, %v212, 0
        %v230 = vsel %vm219, %v214, 0
        %v232 = vsel %vm219, %v216, 0
        %v234 = vsel %vm219, %v218, 0
        %236 = vmatpush.msra.mxu0 0.0
        %237 = vmatpush.msra.mxu0 0.0
        %238 = vmatpush.msra.mxu0 0.0
        %239 = vmatpush.msra.mxu0 0.0
        %240 = vmatpush.msra.mxu0 0.0
        %241 = vmatpush.msra.mxu0 0.0
        %242 = vmatpush.msra.mxu0 0.0
        %243 = vmatpush.msra.mxu0 0.0
        %244 = vmatpush.msra.mxu0 0.0
        %245 = vmatpush.msra.mxu0 0.0
        %246 = vmatpush.msra.mxu0 0.0
        %247 = vmatpush.msra.mxu0 0.0
        %248 = vmatpush.msra.mxu0 0.0
        %249 = vmatpush.msra.mxu0 0.0
        %250 = vmatpush.msra.mxu0 0.0
        %251 = vmatpush.msra.mxu0 %v191
        %252 = vmatmul.f32.gmra.mxu0 %v220
        %v253 = vpop.f32.mrf.mxu0
        %v254 = vadd.f32 0.0, %v253
        %255 = vmatmul.f32.gmra.mxu0 %v222
        %v256 = vpop.f32.mrf.mxu0
        %v257 = vadd.f32 0.0, %v256
        %258 = vmatmul.f32.gmra.mxu0 %v224
        %v259 = vpop.f32.mrf.mxu0
        %v260 = vadd.f32 0.0, %v259
        %261 = vmatmul.f32.gmra.mxu0 %v226
        %v262 = vpop.f32.mrf.mxu0
        %v263 = vadd.f32 0.0, %v262
        %264 = vmatmul.f32.gmra.mxu0 %v228
        %v265 = vpop.f32.mrf.mxu0
        %v266 = vadd.f32 0.0, %v265
        %267 = vmatmul.f32.gmra.mxu0 %v230
        %v268 = vpop.f32.mrf.mxu0
        %v269 = vadd.f32 0.0, %v268
        %270 = vmatmul.f32.gmra.mxu0 %v232
        %v271 = vpop.f32.mrf.mxu0
        %v272 = vadd.f32 0.0, %v271
        %273 = vmatmul.f32.gmra.mxu0 %v234
        %v274 = vpop.f32.mrf.mxu0
        %v275 = vadd.f32 0.0, %v274
        %276 = vdwg.mxu0
        %v277 = vsel %vm219, %v180, 0
        %v279 = vsel %vm219, %v181, 0
        %v281 = vsel %vm219, %v182, 0
        %v283 = vsel %vm219, %v183, 0
        %v285 = vsel %vm219, %v184, 0
        %v287 = vsel %vm219, %v185, 0
        %v289 = vsel %vm219, %v186, 0
        %v291 = vsel %vm219, %v187, 0
        %293 = vmatpush.msra.mxu0 0.0
        %294 = vmatpush.msra.mxu0 0.0
        %295 = vmatpush.msra.mxu0 0.0
        %296 = vmatpush.msra.mxu0 0.0
        %297 = vmatpush.msra.mxu0 0.0
        %298 = vmatpush.msra.mxu0 0.0
        %299 = vmatpush.msra.mxu0 0.0
        %300 = vmatpush.msra.mxu0 0.0
        %301 = vmatpush.msra.mxu0 0.0
        %302 = vmatpush.msra.mxu0 0.0
        %303 = vmatpush.msra.mxu0 0.0
        %304 = vmatpush.msra.mxu0 0.0
        %305 = vmatpush.msra.mxu0 0.0
        %306 = vmatpush.msra.mxu0 0.0
        %307 = vmatpush.msra.mxu0 0.0
        %308 = vmatpush.msra.mxu0 %v189
        %309 = vmatmul.f32.gmra.mxu0 %v277
        %v310 = vpop.f32.mrf.mxu0
        %v311 = vadd.f32 %v254, %v310
        %312 = vmatmul.f32.gmra.mxu0 %v279
        %v313 = vpop.f32.mrf.mxu0
        %v314 = vadd.f32 %v257, %v313
        %315 = vmatmul.f32.gmra.mxu0 %v281
        %v316 = vpop.f32.mrf.mxu0
        %v317 = vadd.f32 %v260, %v316
        %318 = vmatmul.f32.gmra.mxu0 %v283
        %v319 = vpop.f32.mrf.mxu0
        %v320 = vadd.f32 %v263, %v319
        %321 = vmatmul.f32.gmra.mxu0 %v285
        %v322 = vpop.f32.mrf.mxu0
        %v323 = vadd.f32 %v266, %v322
        %324 = vmatmul.f32.gmra.mxu0 %v287
        %v325 = vpop.f32.mrf.mxu0
        %v326 = vadd.f32 %v269, %v325
        %327 = vmatmul.f32.gmra.mxu0 %v289
        %v328 = vpop.f32.mrf.mxu0
        %v329 = vadd.f32 %v272, %v328
        %330 = vmatmul.f32.gmra.mxu0 %v291
        %v331 = vpop.f32.mrf.mxu0
        %v332 = vadd.f32 %v275, %v331
        %333 = vdwg.mxu0
        %s334 = scalar_lea.vmem %s1, 16
        %v335 = vld [vmem:[%s334] sm:$0xff]
        %vm336 = vcmask 1045504
        %v337 = vrot.slane %v180, 2
        %v338 = vrot.slane %v181, 2
        %v339 = vsel %vm336, %v337, %v338
        %v340 = vrot.slane %v182, 2
        %v341 = vsel %vm336, %v338, %v340
        %v342 = vrot.slane %v183, 2
        %v343 = vsel %vm336, %v340, %v342
        %v344 = vrot.slane %v184, 2
        %v345 = vsel %vm336, %v342, %v344
        %v346 = vrot.slane %v185, 2
        %v347 = vsel %vm336, %v344, %v346
        %v348 = vrot.slane %v186, 2
        %v349 = vsel %vm336, %v346, %v348
        %v350 = vrot.slane %v187, 2
        %v351 = vsel %vm336, %v348, %v350
        %v352 = vrot.slane %v188, 2
        %v353 = vsel %vm336, %v350, %v352
        %v354 = vsel %vm219, %v339, 0
        %v356 = vsel %vm219, %v341, 0
        %v358 = vsel %vm219, %v343, 0
        %v360 = vsel %vm219, %v345, 0
        %v362 = vsel %vm219, %v347, 0
        %v364 = vsel %vm219, %v349, 0
        %v366 = vsel %vm219, %v351, 0
        %v368 = vsel %vm219, %v353, 0
        %370 = vmatpush.msra.mxu0 0.0
        %371 = vmatpush.msra.mxu0 0.0
        %372 = vmatpush.msra.mxu0 0.0
        %373 = vmatpush.msra.mxu0 0.0
        %374 = vmatpush.msra.mxu0 0.0
        %375 = vmatpush.msra.mxu0 0.0
        %376 = vmatpush.msra.mxu0 0.0
        %377 = vmatpush.msra.mxu0 0.0
        %378 = vmatpush.msra.mxu0 0.0
        %379 = vmatpush.msra.mxu0 0.0
        %380 = vmatpush.msra.mxu0 0.0
        %381 = vmatpush.msra.mxu0 0.0
        %382 = vmatpush.msra.mxu0 0.0
        %383 = vmatpush.msra.mxu0 0.0
        %384 = vmatpush.msra.mxu0 0.0
        %385 = vmatpush.msra.mxu0 %v335
        %386 = vmatmul.f32.gmra.mxu0 %v354
        %v387 = vpop.f32.mrf.mxu0
        %v388 = vadd.f32 0.0, %v387
        %389 = vmatmul.f32.gmra.mxu0 %v356
        %v390 = vpop.f32.mrf.mxu0
        %v391 = vadd.f32 0.0, %v390
        %392 = vmatmul.f32.gmra.mxu0 %v358
        %v393 = vpop.f32.mrf.mxu0
        %v394 = vadd.f32 0.0, %v393
        %395 = vmatmul.f32.gmra.mxu0 %v360
        %v396 = vpop.f32.mrf.mxu0
        %v397 = vadd.f32 0.0, %v396
        %398 = vmatmul.f32.gmra.mxu0 %v362
        %v399 = vpop.f32.mrf.mxu0
        %v400 = vadd.f32 0.0, %v399
        %401 = vmatmul.f32.gmra.mxu0 %v364
        %v402 = vpop.f32.mrf.mxu0
        %v403 = vadd.f32 0.0, %v402
        %404 = vmatmul.f32.gmra.mxu0 %v366
        %v405 = vpop.f32.mrf.mxu0
        %v406 = vadd.f32 0.0, %v405
        %407 = vmatmul.f32.gmra.mxu0 %v368
        %v408 = vpop.f32.mrf.mxu0
        %v409 = vadd.f32 0.0, %v408
        %410 = vdwg.mxu0
        %v411 = vadd.f32 %v311, %v388
        %v412 = vadd.f32 %v314, %v391
        %v413 = vadd.f32 %v317, %v394
        %v414 = vadd.f32 %v320, %v397
        %v415 = vadd.f32 %v323, %v400
        %v416 = vadd.f32 %v326, %v403
        %v417 = vadd.f32 %v329, %v406
        %v418 = vadd.f32 %v332, %v409
        %s419 = sadd.s32 %s173, 1
        %s420 = smul.u32 %s419, 72
        %s421 = scalar_lea.vmem %s165, %s420
        %v422 = vld [vmem:[%s421] sm:$0xff]
        %v423 = vld [vmem:[%s421 + $0x8] sm:$0xff]
        %v424 = vld [vmem:[%s421 + $0x10] sm:$0xff]
        %v425 = vld [vmem:[%s421 + $0x18] sm:$0xff]
        %v426 = vld [vmem:[%s421 + $0x20] sm:$0xff]
        %v427 = vld [vmem:[%s421 + $0x28] sm:$0xff]
        %v428 = vld [vmem:[%s421 + $0x30] sm:$0xff]
        %v429 = vld [vmem:[%s421 + $0x38] sm:$0xff]
        %v430 = vld [vmem:[%s421 + $0x40] sm:$0x3]
        %s431 = scalar_lea.vmem %s1, 24
        %v432 = vld [vmem:[%s431] sm:$0xff]
        %v434 = vsel %vm219, %v422, 0
        %v437 = vsel %vm219, %v423, 0
        %v440 = vsel %vm219, %v424, 0
        %v443 = vsel %vm219, %v425, 0
        %v446 = vsel %vm219, %v426, 0
        %v449 = vsel %vm219, %v427, 0
        %v452 = vsel %vm219, %v428, 0
        %v455 = vsel %vm219, %v429, 0
        %457 = vmatpush.msra.mxu0 0.0
        %458 = vmatpush.msra.mxu0 0.0
        %459 = vmatpush.msra.mxu0 0.0
        %460 = vmatpush.msra.mxu0 0.0
        %461 = vmatpush.msra.mxu0 0.0
        %462 = vmatpush.msra.mxu0 0.0
        %463 = vmatpush.msra.mxu0 0.0
        %464 = vmatpush.msra.mxu0 0.0
        %465 = vmatpush.msra.mxu0 0.0
        %466 = vmatpush.msra.mxu0 0.0
        %467 = vmatpush.msra.mxu0 0.0
        %468 = vmatpush.msra.mxu0 0.0
        %469 = vmatpush.msra.mxu0 0.0
        %470 = vmatpush.msra.mxu0 0.0
        %471 = vmatpush.msra.mxu0 0.0
        %472 = vmatpush.msra.mxu0 %v432
        %473 = vmatmul.f32.gmra.mxu0 %v434
        %v474 = vpop.f32.mrf.mxu0
        %v475 = vadd.f32 0.0, %v474
        %476 = vmatmul.f32.gmra.mxu0 %v437
        %v477 = vpop.f32.mrf.mxu0
        %v478 = vadd.f32 0.0, %v477
        %479 = vmatmul.f32.gmra.mxu0 %v440
        %v480 = vpop.f32.mrf.mxu0
        %v481 = vadd.f32 0.0, %v480
        %482 = vmatmul.f32.gmra.mxu0 %v443
        %v483 = vpop.f32.mrf.mxu0
        %v484 = vadd.f32 0.0, %v483
        %485 = vmatmul.f32.gmra.mxu0 %v446
        %v486 = vpop.f32.mrf.mxu0
        %v487 = vadd.f32 0.0, %v486
        %488 = vmatmul.f32.gmra.mxu0 %v449
        %v489 = vpop.f32.mrf.mxu0
        %v490 = vadd.f32 0.0, %v489
        %491 = vmatmul.f32.gmra.mxu0 %v452
        %v492 = vpop.f32.mrf.mxu0
        %v493 = vadd.f32 0.0, %v492
        %494 = vmatmul.f32.gmra.mxu0 %v455
        %v495 = vpop.f32.mrf.mxu0
        %v496 = vadd.f32 0.0, %v495
        %497 = vdwg.mxu0
        %v498 = vadd.f32 %v411, %v475
        %v499 = vadd.f32 %v412, %v478
        %v500 = vadd.f32 %v413, %v481
        %v501 = vadd.f32 %v414, %v484
        %v502 = vadd.f32 %v415, %v487
        %v503 = vadd.f32 %v416, %v490
        %v504 = vadd.f32 %v417, %v493
        %v505 = vadd.f32 %v418, %v496
        %s506 = scalar_lea.vmem %s1, 32
        %v507 = vld [vmem:[%s506] sm:$0xff]
        %v509 = vrot.slane %v422, 1
        %v510 = vrot.slane %v423, 1
        %v511 = vsel %vm201, %v509, %v510
        %v512 = vrot.slane %v424, 1
        %v513 = vsel %vm201, %v510, %v512
        %v514 = vrot.slane %v425, 1
        %v515 = vsel %vm201, %v512, %v514
        %v516 = vrot.slane %v426, 1
        %v517 = vsel %vm201, %v514, %v516
        %v518 = vrot.slane %v427, 1
        %v519 = vsel %vm201, %v516, %v518
        %v520 = vrot.slane %v428, 1
        %v521 = vsel %vm201, %v518, %v520
        %v522 = vrot.slane %v429, 1
        %v523 = vsel %vm201, %v520, %v522
        %v524 = vrot.slane %v430, 1
        %v525 = vsel %vm201, %v522, %v524
        %v526 = vsel %vm219, %v511, 0
        %v528 = vsel %vm219, %v513, 0
        %v530 = vsel %vm219, %v515, 0
        %v532 = vsel %vm219, %v517, 0
        %v534 = vsel %vm219, %v519, 0
        %v536 = vsel %vm219, %v521, 0
        %v538 = vsel %vm219, %v523, 0
        %v540 = vsel %vm219, %v525, 0
        %542 = vmatpush.msra.mxu0 0.0
        %543 = vmatpush.msra.mxu0 0.0
        %544 = vmatpush.msra.mxu0 0.0
        %545 = vmatpush.msra.mxu0 0.0
        %546 = vmatpush.msra.mxu0 0.0
        %547 = vmatpush.msra.mxu0 0.0
        %548 = vmatpush.msra.mxu0 0.0
        %549 = vmatpush.msra.mxu0 0.0
        %550 = vmatpush.msra.mxu0 0.0
        %551 = vmatpush.msra.mxu0 0.0
        %552 = vmatpush.msra.mxu0 0.0
        %553 = vmatpush.msra.mxu0 0.0
        %554 = vmatpush.msra.mxu0 0.0
        %555 = vmatpush.msra.mxu0 0.0
        %556 = vmatpush.msra.mxu0 0.0
        %557 = vmatpush.msra.mxu0 %v507
        %558 = vmatmul.f32.gmra.mxu0 %v526
        %v559 = vpop.f32.mrf.mxu0
        %v560 = vadd.f32 0.0, %v559
        %561 = vmatmul.f32.gmra.mxu0 %v528
        %v562 = vpop.f32.mrf.mxu0
        %v563 = vadd.f32 0.0, %v562
        %564 = vmatmul.f32.gmra.mxu0 %v530
        %v565 = vpop.f32.mrf.mxu0
        %v566 = vadd.f32 0.0, %v565
        %567 = vmatmul.f32.gmra.mxu0 %v532
        %v568 = vpop.f32.mrf.mxu0
        %v569 = vadd.f32 0.0, %v568
        %570 = vmatmul.f32.gmra.mxu0 %v534
        %v571 = vpop.f32.mrf.mxu0
        %v572 = vadd.f32 0.0, %v571
        %573 = vmatmul.f32.gmra.mxu0 %v536
        %v574 = vpop.f32.mrf.mxu0
        %v575 = vadd.f32 0.0, %v574
        %576 = vmatmul.f32.gmra.mxu0 %v538
        %v577 = vpop.f32.mrf.mxu0
        %v578 = vadd.f32 0.0, %v577
        %579 = vmatmul.f32.gmra.mxu0 %v540
        %v580 = vpop.f32.mrf.mxu0
        %v581 = vadd.f32 0.0, %v580
        %582 = vdwg.mxu0
        %v583 = vadd.f32 %v498, %v560
        %v584 = vadd.f32 %v499, %v563
        %v585 = vadd.f32 %v500, %v566
        %v586 = vadd.f32 %v501, %v569
        %v587 = vadd.f32 %v502, %v572
        %v588 = vadd.f32 %v503, %v575
        %v589 = vadd.f32 %v504, %v578
        %v590 = vadd.f32 %v505, %v581
        %s591 = scalar_lea.vmem %s1, 40
        %v592 = vld [vmem:[%s591] sm:$0xff]
        %v593 = vrot.slane %v422, 2
        %v594 = vrot.slane %v423, 2
        %v595 = vsel %vm336, %v593, %v594
        %v596 = vrot.slane %v424, 2
        %v597 = vsel %vm336, %v594, %v596
        %v598 = vrot.slane %v425, 2
        %v599 = vsel %vm336, %v596, %v598
        %v600 = vrot.slane %v426, 2
        %v601 = vsel %vm336, %v598, %v600
        %v602 = vrot.slane %v427, 2
        %v603 = vsel %vm336, %v600, %v602
        %v604 = vrot.slane %v428, 2
        %v605 = vsel %vm336, %v602, %v604
        %v606 = vrot.slane %v429, 2
        %v607 = vsel %vm336, %v604, %v606
        %v608 = vrot.slane %v430, 2
        %v609 = vsel %vm336, %v606, %v608
        %v610 = vsel %vm219, %v595, 0
        %v612 = vsel %vm219, %v597, 0
        %v614 = vsel %vm219, %v599, 0
        %v616 = vsel %vm219, %v601, 0
        %v618 = vsel %vm219, %v603, 0
        %v620 = vsel %vm219, %v605, 0
        %v622 = vsel %vm219, %v607, 0
        %v624 = vsel %vm219, %v609, 0
        %626 = vmatpush.msra.mxu0 0.0
        %627 = vmatpush.msra.mxu0 0.0
        %628 = vmatpush.msra.mxu0 0.0
        %629 = vmatpush.msra.mxu0 0.0
        %630 = vmatpush.msra.mxu0 0.0
        %631 = vmatpush.msra.mxu0 0.0
        %632 = vmatpush.msra.mxu0 0.0
        %633 = vmatpush.msra.mxu0 0.0
        %634 = vmatpush.msra.mxu0 0.0
        %635 = vmatpush.msra.mxu0 0.0
        %636 = vmatpush.msra.mxu0 0.0
        %637 = vmatpush.msra.mxu0 0.0
        %638 = vmatpush.msra.mxu0 0.0
        %639 = vmatpush.msra.mxu0 0.0
        %640 = vmatpush.msra.mxu0 0.0
        %641 = vmatpush.msra.mxu0 %v592
        %642 = vmatmul.f32.gmra.mxu0 %v610
        %v643 = vpop.f32.mrf.mxu0
        %v644 = vadd.f32 0.0, %v643
        %645 = vmatmul.f32.gmra.mxu0 %v612
        %v646 = vpop.f32.mrf.mxu0
        %v647 = vadd.f32 0.0, %v646
        %648 = vmatmul.f32.gmra.mxu0 %v614
        %v649 = vpop.f32.mrf.mxu0
        %v650 = vadd.f32 0.0, %v649
        %651 = vmatmul.f32.gmra.mxu0 %v616
        %v652 = vpop.f32.mrf.mxu0
        %v653 = vadd.f32 0.0, %v652
        %654 = vmatmul.f32.gmra.mxu0 %v618
        %v655 = vpop.f32.mrf.mxu0
        %v656 = vadd.f32 0.0, %v655
        %657 = vmatmul.f32.gmra.mxu0 %v620
        %v658 = vpop.f32.mrf.mxu0
        %v659 = vadd.f32 0.0, %v658
        %660 = vmatmul.f32.gmra.mxu0 %v622
        %v661 = vpop.f32.mrf.mxu0
        %v662 = vadd.f32 0.0, %v661
        %663 = vmatmul.f32.gmra.mxu0 %v624
        %v664 = vpop.f32.mrf.mxu0
        %v665 = vadd.f32 0.0, %v664
        %666 = vdwg.mxu0
        %v667 = vadd.f32 %v583, %v644
        %v668 = vadd.f32 %v584, %v647
        %v669 = vadd.f32 %v585, %v650
        %v670 = vadd.f32 %v586, %v653
        %v671 = vadd.f32 %v587, %v656
        %v672 = vadd.f32 %v588, %v659
        %v673 = vadd.f32 %v589, %v662
        %v674 = vadd.f32 %v590, %v665
        %s675 = sadd.s32 %s173, 2
        %s676 = smul.u32 %s675, 72
        %s677 = scalar_lea.vmem %s165, %s676
        %v678 = vld [vmem:[%s677] sm:$0xff]
        %v679 = vld [vmem:[%s677 + $0x8] sm:$0xff]
        %v680 = vld [vmem:[%s677 + $0x10] sm:$0xff]
        %v681 = vld [vmem:[%s677 + $0x18] sm:$0xff]
        %v682 = vld [vmem:[%s677 + $0x20] sm:$0xff]
        %v683 = vld [vmem:[%s677 + $0x28] sm:$0xff]
        %v684 = vld [vmem:[%s677 + $0x30] sm:$0xff]
        %v685 = vld [vmem:[%s677 + $0x38] sm:$0xff]
        %v686 = vld [vmem:[%s677 + $0x40] sm:$0x3]
        %s687 = scalar_lea.vmem %s1, 48
        %v688 = vld [vmem:[%s687] sm:$0xff]
        %v690 = vsel %vm219, %v678, 0
        %v693 = vsel %vm219, %v679, 0
        %v696 = vsel %vm219, %v680, 0
        %v699 = vsel %vm219, %v681, 0
        %v702 = vsel %vm219, %v682, 0
        %v705 = vsel %vm219, %v683, 0
        %v708 = vsel %vm219, %v684, 0
        %v711 = vsel %vm219, %v685, 0
        %713 = vmatpush.msra.mxu0 0.0
        %714 = vmatpush.msra.mxu0 0.0
        %715 = vmatpush.msra.mxu0 0.0
        %716 = vmatpush.msra.mxu0 0.0
        %717 = vmatpush.msra.mxu0 0.0
        %718 = vmatpush.msra.mxu0 0.0
        %719 = vmatpush.msra.mxu0 0.0
        %720 = vmatpush.msra.mxu0 0.0
        %721 = vmatpush.msra.mxu0 0.0
        %722 = vmatpush.msra.mxu0 0.0
        %723 = vmatpush.msra.mxu0 0.0
        %724 = vmatpush.msra.mxu0 0.0
        %725 = vmatpush.msra.mxu0 0.0
        %726 = vmatpush.msra.mxu0 0.0
        %727 = vmatpush.msra.mxu0 0.0
        %728 = vmatpush.msra.mxu0 %v688
        %729 = vmatmul.f32.gmra.mxu0 %v690
        %v730 = vpop.f32.mrf.mxu0
        %v731 = vadd.f32 0.0, %v730
        %732 = vmatmul.f32.gmra.mxu0 %v693
        %v733 = vpop.f32.mrf.mxu0
        %v734 = vadd.f32 0.0, %v733
        %735 = vmatmul.f32.gmra.mxu0 %v696
        %v736 = vpop.f32.mrf.mxu0
        %v737 = vadd.f32 0.0, %v736
        %738 = vmatmul.f32.gmra.mxu0 %v699
        %v739 = vpop.f32.mrf.mxu0
        %v740 = vadd.f32 0.0, %v739
        %741 = vmatmul.f32.gmra.mxu0 %v702
        %v742 = vpop.f32.mrf.mxu0
        %v743 = vadd.f32 0.0, %v742
        %744 = vmatmul.f32.gmra.mxu0 %v705
        %v745 = vpop.f32.mrf.mxu0
        %v746 = vadd.f32 0.0, %v745
        %747 = vmatmul.f32.gmra.mxu0 %v708
        %v748 = vpop.f32.mrf.mxu0
        %v749 = vadd.f32 0.0, %v748
        %750 = vmatmul.f32.gmra.mxu0 %v711
        %v751 = vpop.f32.mrf.mxu0
        %v752 = vadd.f32 0.0, %v751
        %753 = vdwg.mxu0
        %v754 = vadd.f32 %v667, %v731
        %v755 = vadd.f32 %v668, %v734
        %v756 = vadd.f32 %v669, %v737
        %v757 = vadd.f32 %v670, %v740
        %v758 = vadd.f32 %v671, %v743
        %v759 = vadd.f32 %v672, %v746
        %v760 = vadd.f32 %v673, %v749
        %v761 = vadd.f32 %v674, %v752
        %s762 = scalar_lea.vmem %s1, 56
        %v763 = vld [vmem:[%s762] sm:$0xff]
        %v765 = vrot.slane %v678, 1
        %v766 = vrot.slane %v679, 1
        %v767 = vsel %vm201, %v765, %v766
        %v768 = vrot.slane %v680, 1
        %v769 = vsel %vm201, %v766, %v768
        %v770 = vrot.slane %v681, 1
        %v771 = vsel %vm201, %v768, %v770
        %v772 = vrot.slane %v682, 1
        %v773 = vsel %vm201, %v770, %v772
        %v774 = vrot.slane %v683, 1
        %v775 = vsel %vm201, %v772, %v774
        %v776 = vrot.slane %v684, 1
        %v777 = vsel %vm201, %v774, %v776
        %v778 = vrot.slane %v685, 1
        %v779 = vsel %vm201, %v776, %v778
        %v780 = vrot.slane %v686, 1
        %v781 = vsel %vm201, %v778, %v780
        %v782 = vsel %vm219, %v767, 0
        %v784 = vsel %vm219, %v769, 0
        %v786 = vsel %vm219, %v771, 0
        %v788 = vsel %vm219, %v773, 0
        %v790 = vsel %vm219, %v775, 0
        %v792 = vsel %vm219, %v777, 0
        %v794 = vsel %vm219, %v779, 0
        %v796 = vsel %vm219, %v781, 0
        %798 = vmatpush.msra.mxu0 0.0
        %799 = vmatpush.msra.mxu0 0.0
        %800 = vmatpush.msra.mxu0 0.0
        %801 = vmatpush.msra.mxu0 0.0
        %802 = vmatpush.msra.mxu0 0.0
        %803 = vmatpush.msra.mxu0 0.0
        %804 = vmatpush.msra.mxu0 0.0
        %805 = vmatpush.msra.mxu0 0.0
        %806 = vmatpush.msra.mxu0 0.0
        %807 = vmatpush.msra.mxu0 0.0
        %808 = vmatpush.msra.mxu0 0.0
        %809 = vmatpush.msra.mxu0 0.0
        %810 = vmatpush.msra.mxu0 0.0
        %811 = vmatpush.msra.mxu0 0.0
        %812 = vmatpush.msra.mxu0 0.0
        %813 = vmatpush.msra.mxu0 %v763
        %814 = vmatmul.f32.gmra.mxu0 %v782
        %v815 = vpop.f32.mrf.mxu0
        %v816 = vadd.f32 0.0, %v815
        %817 = vmatmul.f32.gmra.mxu0 %v784
        %v818 = vpop.f32.mrf.mxu0
        %v819 = vadd.f32 0.0, %v818
        %820 = vmatmul.f32.gmra.mxu0 %v786
        %v821 = vpop.f32.mrf.mxu0
        %v822 = vadd.f32 0.0, %v821
        %823 = vmatmul.f32.gmra.mxu0 %v788
        %v824 = vpop.f32.mrf.mxu0
        %v825 = vadd.f32 0.0, %v824
        %826 = vmatmul.f32.gmra.mxu0 %v790
        %v827 = vpop.f32.mrf.mxu0
        %v828 = vadd.f32 0.0, %v827
        %829 = vmatmul.f32.gmra.mxu0 %v792
        %v830 = vpop.f32.mrf.mxu0
        %v831 = vadd.f32 0.0, %v830
        %832 = vmatmul.f32.gmra.mxu0 %v794
        %v833 = vpop.f32.mrf.mxu0
        %v834 = vadd.f32 0.0, %v833
        %835 = vmatmul.f32.gmra.mxu0 %v796
        %v836 = vpop.f32.mrf.mxu0
        %v837 = vadd.f32 0.0, %v836
        %838 = vdwg.mxu0
        %v839 = vadd.f32 %v754, %v816
        %v840 = vadd.f32 %v755, %v819
        %v841 = vadd.f32 %v756, %v822
        %v842 = vadd.f32 %v757, %v825
        %v843 = vadd.f32 %v758, %v828
        %v844 = vadd.f32 %v759, %v831
        %v845 = vadd.f32 %v760, %v834
        %v846 = vadd.f32 %v761, %v837
        %s847 = scalar_lea.vmem %s1, 64
        %v848 = vld [vmem:[%s847] sm:$0xff]
        %v849 = vrot.slane %v678, 2
        %v850 = vrot.slane %v679, 2
        %v851 = vsel %vm336, %v849, %v850
        %v852 = vrot.slane %v680, 2
        %v853 = vsel %vm336, %v850, %v852
        %v854 = vrot.slane %v681, 2
        %v855 = vsel %vm336, %v852, %v854
        %v856 = vrot.slane %v682, 2
        %v857 = vsel %vm336, %v854, %v856
        %v858 = vrot.slane %v683, 2
        %v859 = vsel %vm336, %v856, %v858
        %v860 = vrot.slane %v684, 2
        %v861 = vsel %vm336, %v858, %v860
        %v862 = vrot.slane %v685, 2
        %v863 = vsel %vm336, %v860, %v862
        %v864 = vrot.slane %v686, 2
        %v865 = vsel %vm336, %v862, %v864
        %v866 = vsel %vm219, %v851, 0
        %v868 = vsel %vm219, %v853, 0
        %v870 = vsel %vm219, %v855, 0
        %v872 = vsel %vm219, %v857, 0
        %v874 = vsel %vm219, %v859, 0
        %v876 = vsel %vm219, %v861, 0
        %v878 = vsel %vm219, %v863, 0
        %v880 = vsel %vm219, %v865, 0
        %882 = vmatpush.msra.mxu0 0.0
        %883 = vmatpush.msra.mxu0 0.0
        %884 = vmatpush.msra.mxu0 0.0
        %885 = vmatpush.msra.mxu0 0.0
        %886 = vmatpush.msra.mxu0 0.0
        %887 = vmatpush.msra.mxu0 0.0
        %888 = vmatpush.msra.mxu0 0.0
        %889 = vmatpush.msra.mxu0 0.0
        %890 = vmatpush.msra.mxu0 0.0
        %891 = vmatpush.msra.mxu0 0.0
        %892 = vmatpush.msra.mxu0 0.0
        %893 = vmatpush.msra.mxu0 0.0
        %894 = vmatpush.msra.mxu0 0.0
        %895 = vmatpush.msra.mxu0 0.0
        %896 = vmatpush.msra.mxu0 0.0
        %897 = vmatpush.msra.mxu0 %v848
        %898 = vmatmul.f32.gmra.mxu0 %v866
        %v899 = vpop.f32.mrf.mxu0
        %v900 = vadd.f32 0.0, %v899
        %901 = vmatmul.f32.gmra.mxu0 %v868
        %v902 = vpop.f32.mrf.mxu0
        %v903 = vadd.f32 0.0, %v902
        %904 = vmatmul.f32.gmra.mxu0 %v870
        %v905 = vpop.f32.mrf.mxu0
        %v906 = vadd.f32 0.0, %v905
        %907 = vmatmul.f32.gmra.mxu0 %v872
        %v908 = vpop.f32.mrf.mxu0
        %v909 = vadd.f32 0.0, %v908
        %910 = vmatmul.f32.gmra.mxu0 %v874
        %v911 = vpop.f32.mrf.mxu0
        %v912 = vadd.f32 0.0, %v911
        %913 = vmatmul.f32.gmra.mxu0 %v876
        %v914 = vpop.f32.mrf.mxu0
        %v915 = vadd.f32 0.0, %v914
        %916 = vmatmul.f32.gmra.mxu0 %v878
        %v917 = vpop.f32.mrf.mxu0
        %v918 = vadd.f32 0.0, %v917
        %919 = vmatmul.f32.gmra.mxu0 %v880
        %v920 = vpop.f32.mrf.mxu0
        %v921 = vadd.f32 0.0, %v920
        %922 = vdwg.mxu0
        %v923 = vadd.f32 %v839, %v900
        %v924 = vadd.f32 %v840, %v903
        %v925 = vadd.f32 %v841, %v906
        %v926 = vadd.f32 %v842, %v909
        %v927 = vadd.f32 %v843, %v912
        %v928 = vadd.f32 %v844, %v915
        %v929 = vadd.f32 %v845, %v918
        %v930 = vadd.f32 %v846, %v921
        %v932 = vperm.slane %v171, 0
        %v934 = vadd.f32 %v923, %v932
        %v935 = vadd.f32 %v924, %v932
        %v936 = vadd.f32 %v925, %v932
        %v937 = vadd.f32 %v926, %v932
        %v938 = vadd.f32 %v927, %v932
        %v939 = vadd.f32 %v928, %v932
        %v940 = vadd.f32 %v929, %v932
        %v941 = vadd.f32 %v930, %v932
        %v942 = vmax.f32 %v934, 0.0
        %v943 = vmax.f32 %v935, 0.0
        %v944 = vmax.f32 %v936, 0.0
        %v945 = vmax.f32 %v937, 0.0
        %v946 = vmax.f32 %v938, 0.0
        %v947 = vmax.f32 %v939, 0.0
        %v948 = vmax.f32 %v940, 0.0
        %v949 = vmax.f32 %v941, 0.0
        %v950 = vand.u32 2147483647, %v934
        %v951 = vand.u32 2147483647, %v935
        %v952 = vand.u32 2147483647, %v936
        %v953 = vand.u32 2147483647, %v937
        %v954 = vand.u32 2147483647, %v938
        %v955 = vand.u32 2147483647, %v939
        %v956 = vand.u32 2147483647, %v940
        %v957 = vand.u32 2147483647, %v941
        %v958 = vsub.f32 0.0, %v950
        %v959 = vsub.f32 0.0, %v951
        %v960 = vsub.f32 0.0, %v952
        %v961 = vsub.f32 0.0, %v953
        %v962 = vsub.f32 0.0, %v954
        %v963 = vsub.f32 0.0, %v955
        %v964 = vsub.f32 0.0, %v956
        %v965 = vsub.f32 0.0, %v957
        %v966 = vmul.f32 %v958, 1.442695
        %v967 = vpow.pop %v966
        %v968 = vmul.f32 %v959, 1.442695
        %v969 = vpow.pop %v968
        %v970 = vmul.f32 %v960, 1.442695
        %v971 = vpow.pop %v970
        %v972 = vmul.f32 %v961, 1.442695
        %v973 = vpow.pop %v972
        %v974 = vmul.f32 %v962, 1.442695
        %v975 = vpow.pop %v974
        %v976 = vmul.f32 %v963, 1.442695
        %v977 = vpow.pop %v976
        %v978 = vmul.f32 %v964, 1.442695
        %v979 = vpow.pop %v978
        %v980 = vmul.f32 %v965, 1.442695
        %v981 = vpow.pop %v980
        %v982 = vadd.f32 %v967, 1.0
        %v983 = vadd.f32 %v969, 1.0
        %v984 = vadd.f32 %v971, 1.0
        %v985 = vadd.f32 %v973, 1.0
        %v986 = vadd.f32 %v975, 1.0
        %v987 = vadd.f32 %v977, 1.0
        %v988 = vadd.f32 %v979, 1.0
        %v989 = vadd.f32 %v981, 1.0
        %v990 = vlog2.pop %v982
        %v991 = vmul.f32 %v990, 0.6931472
        %v992 = vlog2.pop %v983
        %v993 = vmul.f32 %v992, 0.6931472
        %v994 = vlog2.pop %v984
        %v995 = vmul.f32 %v994, 0.6931472
        %v996 = vlog2.pop %v985
        %v997 = vmul.f32 %v996, 0.6931472
        %v998 = vlog2.pop %v986
        %v999 = vmul.f32 %v998, 0.6931472
        %v1000 = vlog2.pop %v987
        %v1001 = vmul.f32 %v1000, 0.6931472
        %v1002 = vlog2.pop %v988
        %v1003 = vmul.f32 %v1002, 0.6931472
        %v1004 = vlog2.pop %v989
        %v1005 = vmul.f32 %v1004, 0.6931472
        %v1006 = vadd.f32 %v942, %v991
        %v1007 = vadd.f32 %v943, %v993
        %v1008 = vadd.f32 %v944, %v995
        %v1009 = vadd.f32 %v945, %v997
        %v1010 = vadd.f32 %v946, %v999
        %v1011 = vadd.f32 %v947, %v1001
        %v1012 = vadd.f32 %v948, %v1003
        %v1013 = vadd.f32 %v949, %v1005
        %v1014 = vtanh.pop %v1006
        %v1015 = vtanh.pop %v1007
        %v1016 = vtanh.pop %v1008
        %v1017 = vtanh.pop %v1009
        %v1018 = vtanh.pop %v1010
        %v1019 = vtanh.pop %v1011
        %v1020 = vtanh.pop %v1012
        %v1021 = vtanh.pop %v1013
        %v1022 = vmul.f32 %v934, %v1014
        %v1023 = vmul.f32 %v935, %v1015
        %v1024 = vmul.f32 %v936, %v1016
        %v1025 = vmul.f32 %v937, %v1017
        %v1026 = vmul.f32 %v938, %v1018
        %v1027 = vmul.f32 %v939, %v1019
        %v1028 = vmul.f32 %v940, %v1020
        %v1029 = vmul.f32 %v941, %v1021
        %s1030 = smul.u32 %s173, 64
        %s1031 = scalar_lea.vmem %s170, %s1030
        %vm1032 = vcmask 261120
        %1033 = vst.msk [vmem:[%s1031] sm:$0xff] %vm1032, %v1022
        %1034 = vst.msk [vmem:[%s1031 + $0x8] sm:$0xff] %vm1032, %v1023
        %1035 = vst.msk [vmem:[%s1031 + $0x10] sm:$0xff] %vm1032, %v1024
        %1036 = vst.msk [vmem:[%s1031 + $0x18] sm:$0xff] %vm1032, %v1025
        %1037 = vst.msk [vmem:[%s1031 + $0x20] sm:$0xff] %vm1032, %v1026
        %1038 = vst.msk [vmem:[%s1031 + $0x28] sm:$0xff] %vm1032, %v1027
        %1039 = vst.msk [vmem:[%s1031 + $0x30] sm:$0xff] %vm1032, %v1028
        %1040 = vst.msk [vmem:[%s1031 + $0x38] sm:$0xff] %vm1032, %v1029
      $region37: #{tpu_custom_call.1} parent=31 // loop_footer
        %s177 = sadd.s32 1, %s173
      $region38: #{tpu_custom_call.1} parent=31 // loop_footer_branch
        %172 = sbr.rel target = $region34
      $region39: #{tpu_custom_call.1} parent=31 // loop_exit
        _
      %p1041 = scmp.lt.s32.totalorder %s14, 1
      %s1042 = scalar_select %p1041, %s14, 1
      %s1043 = smul.addr %s1042, 512
      %s1044 = smul.addr %s1043, 8
      %s1045 = scalar_lea.vmem %s3, %s1044
      // Predicated region
      $region40: #{tpu_custom_call.1} parent=31 // pred_check
        %p1046 = pneg %p100
      $region41: #{tpu_custom_call.1} parent=31 // pred_check_branch
        %1048 = sbr.rel (%p1046) target = $region43
      $region42: #{tpu_custom_call.1} parent=31 // pred_region
        _
      $region43: #{tpu_custom_call.1} parent=31 // pred_fallthru
        _
    $region32: #{tpu_custom_call.1} parent=5 // pred_fallthru
      _
    %p1049 = scmp.le.s32.totalorder 2, %s9
    // Predicated region
    $region44: #{tpu_custom_call.1} parent=5 // pred_check
      %p1050 = pneg %p1049
    $region45: #{tpu_custom_call.1} parent=5 // pred_check_branch
      %1052 = sbr.rel (%p1050) target = $region47
    $region46: #{tpu_custom_call.1} parent=5 // pred_region
      %s1053 = ssub.s32 %s9, 2
      // Predicated region
      $region48: #{tpu_custom_call.1} parent=46 // pred_check
        %p1054 = pneg %p106
      $region49: #{tpu_custom_call.1} parent=46 // pred_check_branch
        %1056 = sbr.rel (%p1054) target = $region51
      $region50: #{tpu_custom_call.1} parent=46 // pred_region
        %p1057 = scmp.lt.s32.totalorder %s15, 1
        %s1058 = scalar_select %p1057, %s15, 1
        %s1059 = smul.addr %s1058, 512
        %s1060 = smul.addr %s1059, 8
        %s1061 = scalar_lea.vmem %s3, %s1060
      $region51: #{tpu_custom_call.1} parent=46 // pred_fallthru
        _
    $region47: #{tpu_custom_call.1} parent=5 // pred_fallthru
      _
  $region6: #{tpu_custom_call.1} parent=0 // loop_footer
    %s13 = sadd.s32 1, %s9
  $region7: #{tpu_custom_call.1} parent=0 // loop_footer_branch
    %8 = sbr.rel target = $region3
  $region8: #{tpu_custom_call.1} parent=0 // loop_exit
    _

</llo_original>
